<compile_context>
chip_gen: v7x
topology: tpu7x:2x2x1
jax: 0.10.0
libtpu: 0.0.40
codegen_flags: <defaults>
</compile_context>

<pallas_src>
import functools

import jax
import jax.numpy as jnp
from jax.experimental import pallas as pl
from jax.experimental.pallas import tpu as pltpu

BN_EPS = 1e-5
LANE = 128
SUBLANE = 8


def _round_up(x, m):
    return (x + m - 1) // m * m


# --------------------------------------------------------------------------
# Kernel 1: tiled conv-as-matmul (bf16 on the MXU) + per-tile BN partials
# --------------------------------------------------------------------------
def _conv_stats_kernel(p_ref, w_ref, o_ref, stats_ref, acc_ref):
    k = pl.program_id(2)

    @pl.when(k == 0)
    def _():
        acc_ref[...] = jnp.zeros_like(acc_ref)

    acc_ref[...] += jnp.dot(p_ref[...], w_ref[...],
                            preferred_element_type=jnp.float32)

    @pl.when(k == pl.num_programs(2) - 1)
    def _():
        acc = acc_ref[...]
        o_ref[...] = acc.astype(o_ref.dtype)
        # per-channel partial sums for this row tile (rows padded with zero
        # patches contribute exactly 0, so dividing by the true row count in
        # the wrapper keeps the batch statistics exact)
        s = jnp.sum(acc, axis=0, keepdims=True)            # (1, TN)
        sq = jnp.sum(acc * acc, axis=0, keepdims=True)     # (1, TN)
        rows = jax.lax.broadcasted_iota(jnp.int32, (8, acc.shape[1]), 0)
        stats_ref[...] = jnp.where(rows == 0, s, jnp.where(rows == 1, sq, 0.0))


# --------------------------------------------------------------------------
# Kernel 2: BN apply (folded scale/bias) + optional residual add + ReLU
# --------------------------------------------------------------------------
def _bn_apply_kernel(has_residual, apply_relu, *refs):
    if has_residual:
        conv_ref, scale_ref, bias_ref, res_ref, o_ref = refs
    else:
        conv_ref, scale_ref, bias_ref, o_ref = refs

    out = conv_ref[...].astype(jnp.float32) * scale_ref[...] + bias_ref[...]
    if has_residual:
        out = out + res_ref[...].astype(jnp.float32)
    if apply_relu:
        out = jnp.maximum(out, 0.0)
    o_ref[...] = out.astype(o_ref.dtype)


# --------------------------------------------------------------------------
# Fused conv (as matmul) + training-mode BatchNorm + residual + ReLU
# --------------------------------------------------------------------------
def conv_bn_act(patches, w_mat, gamma, beta, c_pad, *, residual=None,
                apply_relu=True, out_dtype=jnp.bfloat16):
    """out = [relu]( BN_train(patches @ w_mat) [+ residual] ).

    patches : (R, K)        float; cast to bf16 for the MXU
    w_mat   : (K, c_pad)    weight matrix, channels zero-padded to 128 lanes
    residual: (R, c_pad)    or None
    returns : (R, c_pad)    in out_dtype
    """
    R, K = patches.shape
    assert w_mat.shape == (K, c_pad)

    # ---- tile sizes --------------------------------------------------------
    K_pad = _round_up(K, LANE)
    TM = 512 if R >= 512 else _round_up(R, SUBLANE)      # >=512 rows ~ HBM roofline
    R_pad = _round_up(R, TM)
    TN = 256 if c_pad % 256 == 0 else 128                # MXU-friendly (v6e/v7x)
    TK = 512 if K_pad % 512 == 0 else (256 if K_pad % 256 == 0 else 128)
    m_t, n_t, k_t = R_pad // TM, c_pad // TN, K_pad // TK

    p = jnp.pad(patches.astype(jnp.bfloat16), ((0, R_pad - R), (0, K_pad - K)))
    w = jnp.pad(w_mat.astype(jnp.bfloat16), ((0, K_pad - K), (0, 0)))

    # Tiles here are a few MiB at most; 32 MiB scoped VMEM is safe on
    # v5e / v6e (128 MiB physical) and v7x (64 MiB physical).
    vmem_cap = 32 * 1024 * 1024

    cost1 = pl.CostEstimate(
        flops=2 * R_pad * K_pad * c_pad,
        transcendentals=0,
        bytes_accessed=(R_pad * K_pad * 2 + K_pad * c_pad * 2
                        + R_pad * c_pad * 2 + m_t * 8 * c_pad * 4))

    conv, stats = pl.pallas_call(
        _conv_stats_kernel,
        out_shape=(jax.ShapeDtypeStruct((R_pad, c_pad), jnp.bfloat16),
                   jax.ShapeDtypeStruct((m_t * 8, c_pad), jnp.float32)),
        grid=(m_t, n_t, k_t),
        in_specs=[pl.BlockSpec((TM, TK), lambda m, n, k: (m, k)),
                  pl.BlockSpec((TK, TN), lambda m, n, k: (k, n))],
        out_specs=(pl.BlockSpec((TM, TN), lambda m, n, k: (m, n)),
                   pl.BlockSpec((8, TN), lambda m, n, k: (m, n))),
        scratch_shapes=[pltpu.VMEM((TM, TN), jnp.float32)],
        compiler_params=pltpu.CompilerParams(
            dimension_semantics=("parallel", "parallel", "arbitrary"),
            vmem_limit_bytes=vmem_cap),
        cost_estimate=cost1,
    )(p, w)

    # ---- finalize BN stats (tiny per-channel math in plain JAX) ------------
    stats3 = stats.reshape(m_t, 8, c_pad)
    mean = jnp.sum(stats3[:, 0, :], axis=0) / R
    var = jnp.maximum(jnp.sum(stats3[:, 1, :], axis=0) / R - mean * mean, 0.0)
    gamma_p = jnp.pad(gamma.astype(jnp.float32), (0, c_pad - gamma.shape[0]))
    beta_p = jnp.pad(beta.astype(jnp.float32), (0, c_pad - beta.shape[0]))
    scale = gamma_p * jax.lax.rsqrt(var + BN_EPS)
    bias = beta_p - mean * scale

    inputs = [conv, scale.reshape(1, c_pad), bias.reshape(1, c_pad)]
    in_specs = [pl.BlockSpec((TM, c_pad), lambda m: (m, 0)),
                pl.BlockSpec((1, c_pad), lambda m: (0, 0)),
                pl.BlockSpec((1, c_pad), lambda m: (0, 0))]
    if residual is not None:
        inputs.append(jnp.pad(residual.astype(jnp.bfloat16),
                              ((0, R_pad - R), (0, 0))))
        in_specs.append(pl.BlockSpec((TM, c_pad), lambda m: (m, 0)))

    out_itemsize = 2 if out_dtype == jnp.bfloat16 else 4
    cost2 = pl.CostEstimate(
        flops=3 * R_pad * c_pad,
        transcendentals=0,
        bytes_accessed=(R_pad * c_pad * (2 + (2 if residual is not None else 0)
                                         + out_itemsize) + 2 * c_pad * 4))

    out = pl.pallas_call(
        functools.partial(_bn_apply_kernel, residual is not None, apply_relu),
        out_shape=jax.ShapeDtypeStruct((R_pad, c_pad), out_dtype),
        grid=(m_t,),
        in_specs=in_specs,
        out_specs=pl.BlockSpec((TM, c_pad), lambda m: (m, 0)),
        compiler_params=pltpu.CompilerParams(
            dimension_semantics=("parallel",),
            vmem_limit_bytes=vmem_cap),
        cost_estimate=cost2,
    )(*inputs)
    return out[:R]


# --------------------------------------------------------------------------
# Glue: im2col (bf16), weight reshaping, block wiring (plain JAX)
# --------------------------------------------------------------------------
def im2col_3x3(x_nhwc, stride):
    """3x3, padding=1 patches in bf16: (N*Ho*Wo, 9*C), ordering (kh, kw, cin)."""
    N, H, W, C = x_nhwc.shape
    Ho = (H + 2 - 3) // stride + 1
    Wo = (W + 2 - 3) // stride + 1
    xp = jnp.pad(x_nhwc.astype(jnp.bfloat16), ((0, 0), (1, 1), (1, 1), (0, 0)))
    slices = []
    for kh in range(3):
        for kw in range(3):
            slices.append(
                xp[:, kh:kh + Ho * stride:stride, kw:kw + Wo * stride:stride, :])
    patches = jnp.concatenate(slices, axis=-1)  # (N, Ho, Wo, 9*C)
    # TODO(synk): fuse im2col into the conv kernel (halo DMA / 9-tap reduction
    # axis) so the activation is not expanded 9x in HBM.
    return patches.reshape(N * Ho * Wo, 9 * C), Ho, Wo


def conv3x3_weight_to_mat(w_oihw, c_pad):
    # (Cout, Cin, 3, 3) -> (9*Cin, c_pad), ordering (kh, kw, cin); Cout zero-padded.
    cout = w_oihw.shape[0]
    m = jnp.transpose(w_oihw, (2, 3, 1, 0)).reshape(-1, cout)
    return jnp.pad(m, ((0, 0), (0, c_pad - cout)))


def conv1x1_weight_to_mat(w_oihw, c_pad):
    cout = w_oihw.shape[0]
    m = jnp.transpose(w_oihw[:, :, 0, 0], (1, 0))
    return jnp.pad(m, ((0, 0), (0, c_pad - cout)))


def basic_block_forward(x_nchw, params, stride):
    """Forward pass of BasicBlock(in_planes, planes, stride); x is NCHW f32."""
    x = jnp.transpose(x_nchw, (0, 2, 3, 1)).astype(jnp.float32)  # -> NHWC
    N, H, W, Cin = x.shape
    planes = params["w1"].shape[0]
    c_pad = _round_up(planes, LANE)          # lane-dense output channels

    # conv1 (3x3, stride) + bn1 + relu  -> bf16 activation
    p1, Ho, Wo = im2col_3x3(x, stride)
    act1 = conv_bn_act(p1, conv3x3_weight_to_mat(params["w1"], c_pad),
                       params["g1"], params["b1"], c_pad,
                       apply_relu=True, out_dtype=jnp.bfloat16)
    act1_img = act1[:, :planes].reshape(N, Ho, Wo, planes)

    # shortcut branch (kept at c_pad channels, bf16)
    if stride != 1 or Cin != planes:
        xs = x[:, ::stride, ::stride, :].reshape(N * Ho * Wo, Cin)
        shortcut = conv_bn_act(xs, conv1x1_weight_to_mat(params["ws"], c_pad),
                               params["gs"], params["bs"], c_pad,
                               apply_relu=False, out_dtype=jnp.bfloat16)
    else:
        shortcut = jnp.pad(x.reshape(N * H * W, Cin),
                           ((0, 0), (0, c_pad - Cin))).astype(jnp.bfloat16)

    # conv2 (3x3, stride 1) + bn2 + residual add + relu  -> f32
    p2, _, _ = im2col_3x3(act1_img, 1)
    out2 = conv_bn_act(p2, conv3x3_weight_to_mat(params["w2"], c_pad),
                       params["g2"], params["b2"], c_pad,
                       residual=shortcut, apply_relu=True,
                       out_dtype=jnp.float32)

    out = out2[:, :planes].reshape(N, Ho, Wo, planes)
    return jnp.transpose(out, (0, 3, 1, 2))  # back to NCHW


# --------------------------------------------------------------------------
# Pure-JAX f32 reference (lax conv + training-mode BN) for correctness check
# --------------------------------------------------------------------------
def reference_forward(x, params, stride):
    def conv(inp, w, s, pad):
        return jax.lax.conv_general_dilated(
            inp, w, (s, s), [(pad, pad), (pad, pad)],
            dimension_numbers=("NCHW", "OIHW", "NCHW"))

    def bn(t, g, b):
        mean = t.mean(axis=(0, 2, 3), keepdims=True)
        var = ((t - mean) ** 2).mean(axis=(0, 2, 3), keepdims=True)
        return ((t - mean) * jax.lax.rsqrt(var + BN_EPS)
                * g.reshape(1, -1, 1, 1) + b.reshape(1, -1, 1, 1))

    out = jax.nn.relu(bn(conv(x, params["w1"], stride, 1), params["g1"], params["b1"]))
    out = bn(conv(out, params["w2"], 1, 1), params["g2"], params["b2"])
    if stride != 1 or params["w1"].shape[1] != params["w1"].shape[0]:
        sc = bn(conv(x, params["ws"], stride, 0), params["gs"], params["bs"])
    else:
        sc = x
    return jax.nn.relu(out + sc)


def make_params(key, in_planes, planes, stride):
    ks = jax.random.split(key, 8)
    params = {
        "w1": 0.1 * jax.random.normal(ks[0], (planes, in_planes, 3, 3), jnp.float32),
        "g1": 1.0 + 0.1 * jax.random.normal(ks[1], (planes,), jnp.float32),
        "b1": 0.1 * jax.random.normal(ks[2], (planes,), jnp.float32),
        "w2": 0.1 * jax.random.normal(ks[3], (planes, planes, 3, 3), jnp.float32),
        "g2": 1.0 + 0.1 * jax.random.normal(ks[4], (planes,), jnp.float32),
        "b2": 0.1 * jax.random.normal(ks[5], (planes,), jnp.float32),
    }
    if stride != 1 or in_planes != planes:
        params["ws"] = 0.1 * jax.random.normal(ks[6], (planes, in_planes, 1, 1), jnp.float32)
        params["gs"] = jnp.ones((planes,), jnp.float32)
        params["bs"] = 0.1 * jax.random.normal(ks[7], (planes,), jnp.float32)
    return params


if __name__ == "__main__":
    key = jax.random.PRNGKey(0)
    kx, kp1, kp2 = jax.random.split(key, 3)

    x = jax.random.normal(kx, (2, 4, 16, 16), jnp.float32)
    fwd = jax.jit(basic_block_forward, static_argnums=(2,))

    # Tolerances account for bf16 MXU operands / bf16 intermediates
    # (~0.5-1% relative error vs the pure-f32 reference).
    MAX_TOL, MEAN_TOL = 1e-1, 1e-2

    # Case 1: identity shortcut (in_planes == planes, stride == 1)
    params1 = make_params(kp1, in_planes=4, planes=4, stride=1)
    out1 = fwd(x, params1, 1)
    jax.block_until_ready(out1)
    ref1 = reference_forward(x, params1, 1)
    assert out1.shape == (2, 4, 16, 16)
    d1 = jnp.abs(out1 - ref1)
    assert float(jnp.max(d1)) < MAX_TOL and float(jnp.mean(d1)) < MEAN_TOL, (
        float(jnp.max(d1)), float(jnp.mean(d1)))

    # Case 2: projection shortcut (stride 2, channel expansion 4 -> 8)
    params2 = make_params(kp2, in_planes=4, planes=8, stride=2)
    out2 = fwd(x, params2, 2)
    jax.block_until_ready(out2)
    ref2 = reference_forward(x, params2, 2)
    assert out2.shape == (2, 8, 8, 8)
    d2 = jnp.abs(out2 - ref2)
    assert float(jnp.max(d2)) < MAX_TOL and float(jnp.mean(d2)) < MEAN_TOL, (
        float(jnp.max(d2)), float(jnp.mean(d2)))

    print("KERNEL_OK")
</pallas_src>

<mosaic_0001>
module attributes {stable_mosaic.version = 11 : i64} {
  func.func @_conv_stats_kernel(%arg0: i32, %arg1: i32, %arg2: i32, %arg3: memref<512x128xbf16, #tpu.memory_space<vmem>>, %arg4: memref<128x128xbf16, #tpu.memory_space<vmem>>, %arg5: memref<512x128xbf16, #tpu.memory_space<vmem>>, %arg6: memref<8x128xf32, #tpu.memory_space<vmem>>, %arg7: memref<512x128xf32, #tpu.memory_space<vmem>>) attributes {dimension_semantics = [#tpu.dimension_semantics<parallel>, #tpu.dimension_semantics<parallel>, #tpu.dimension_semantics<arbitrary>], iteration_bounds = array<i64: 1, 1, 1>, scalar_prefetch = 0 : i64, scratch_operands = 1 : i64, tpu.core_type = #tpu.core_type<tc>, window_params = [{transform_indices = @transform_0, window_bounds = array<i64: 512, 128>}, {transform_indices = @transform_1, window_bounds = array<i64: 128, 128>}, {transform_indices = @transform_2, window_bounds = array<i64: 512, 128>}, {transform_indices = @transform_3, window_bounds = array<i64: 8, 128>}]} {
    %c0_i32 = arith.constant 0 : i32
    %0 = arith.cmpi eq, %arg2, %c0_i32 : i32
    %1 = arith.extui %0 : i1 to i32
    %c0_i32_0 = arith.constant 0 : i32
    %2 = arith.cmpi ne, %1, %c0_i32_0 : i32
    scf.if %2 {
      %cst_10 = arith.constant 0.000000e+00 : f32
      %12 = vector.broadcast %cst_10 : f32 to vector<512x128xf32>
      %c0_11 = arith.constant 0 : index
      %c0_12 = arith.constant 0 : index
      %13 = vector.load %arg7[%c0_11, %c0_12] : memref<512x128xf32, #tpu.memory_space<vmem>>, vector<512x128xf32>
      tpu.vector_store %arg7[%c0_11, %c0_12], %12 {strides = array<i32>} : memref<512x128xf32, #tpu.memory_space<vmem>>, vector<512x128xf32>,
    } else {
    }
    %c0 = arith.constant 0 : index
    %c0_1 = arith.constant 0 : index
    %3 = vector.load %arg7[%c0, %c0_1] : memref<512x128xf32, #tpu.memory_space<vmem>>, vector<512x128xf32>
    %c0_2 = arith.constant 0 : index
    %c0_3 = arith.constant 0 : index
    %4 = vector.load %arg3[%c0_2, %c0_3] : memref<512x128xbf16, #tpu.memory_space<vmem>>, vector<512x128xbf16>
    %c0_4 = arith.constant 0 : index
    %c0_5 = arith.constant 0 : index
    %5 = vector.load %arg4[%c0_4, %c0_5] : memref<128x128xbf16, #tpu.memory_space<vmem>>, vector<128x128xbf16>
    %cst = arith.constant dense<0.000000e+00> : vector<512x128xf32>
    %6 = tpu.matmul %4, %5, %cst {dimension_numbers = #tpu.dot_dimension_numbers<[1], [0], [0], [1], [0, 0, 1, 1], [], []>} : vector<512x128xbf16>, vector<128x128xbf16>, vector<512x128xf32> -> vector<512x128xf32>
    %7 = arith.addf %3, %6 : vector<512x128xf32>
    %c0_6 = arith.constant 0 : index
    %c0_7 = arith.constant 0 : index
    %8 = vector.load %arg7[%c0_6, %c0_7] : memref<512x128xf32, #tpu.memory_space<vmem>>, vector<512x128xf32>
    tpu.vector_store %arg7[%c0_6, %c0_7], %7 {strides = array<i32>} : memref<512x128xf32, #tpu.memory_space<vmem>>, vector<512x128xf32>,
    %c0_i32_8 = arith.constant 0 : i32
    %9 = arith.cmpi eq, %arg2, %c0_i32_8 : i32
    %10 = arith.extui %9 : i1 to i32
    %c0_i32_9 = arith.constant 0 : i32
    %11 = arith.cmpi ne, %10, %c0_i32_9 : i32
    scf.if %11 {
      %c0_10 = arith.constant 0 : index
      %c0_11 = arith.constant 0 : index
      %12 = vector.load %arg7[%c0_10, %c0_11] : memref<512x128xf32, #tpu.memory_space<vmem>>, vector<512x128xf32>
      %13 = arith.truncf %12 : vector<512x128xf32> to vector<512x128xbf16>
      %c0_12 = arith.constant 0 : index
      %c0_13 = arith.constant 0 : index
      %14 = vector.load %arg5[%c0_12, %c0_13] : memref<512x128xbf16, #tpu.memory_space<vmem>>, vector<512x128xbf16>
      tpu.vector_store %arg5[%c0_12, %c0_13], %13 {strides = array<i32>} : memref<512x128xbf16, #tpu.memory_space<vmem>>, vector<512x128xbf16>,
      %cst_14 = arith.constant dense<0.000000e+00> : vector<128xf32>
      %15 = vector.multi_reduction <add>, %12, %cst_14 [0] : vector<512x128xf32> to vector<128xf32>
      %16 = vector.shape_cast %15 : vector<128xf32> to vector<1x128xf32>
      %17 = arith.mulf %12, %12 : vector<512x128xf32>
      %cst_15 = arith.constant dense<0.000000e+00> : vector<128xf32>
      %18 = vector.multi_reduction <add>, %17, %cst_15 [0] : vector<512x128xf32> to vector<128xf32>
      %19 = vector.shape_cast %18 : vector<128xf32> to vector<1x128xf32>
      %20 = tpu.iota {dimensions = array<i32: 0>} : vector<8x128xi32>
      %c0_i32_16 = arith.constant 0 : i32
      %21 = vector.broadcast %c0_i32_16 : i32 to vector<8x128xi32>
      %22 = arith.cmpi eq, %20, %21 : vector<8x128xi32>
      %c1_i32 = arith.constant 1 : i32
      %23 = vector.broadcast %c1_i32 : i32 to vector<8x128xi32>
      %24 = arith.cmpi eq, %20, %23 : vector<8x128xi32>
      %cst_17 = arith.constant 0.000000e+00 : f32
      %25 = vector.shape_cast %19 : vector<1x128xf32> to vector<1x128xf32>
      %26 = vector.broadcast %25 : vector<1x128xf32> to vector<8x128xf32>
      %27 = vector.broadcast %cst_17 : f32 to vector<8x128xf32>
      %28 = arith.select %24, %26, %27 : vector<8x128xi1>, vector<8x128xf32>
      %29 = vector.shape_cast %16 : vector<1x128xf32> to vector<1x128xf32>
      %30 = vector.broadcast %29 : vector<1x128xf32> to vector<8x128xf32>
      %31 = arith.select %22, %30, %28 : vector<8x128xi1>, vector<8x128xf32>
      %c0_18 = arith.constant 0 : index
      %c0_19 = arith.constant 0 : index
      %32 = vector.load %arg6[%c0_18, %c0_19] : memref<8x128xf32, #tpu.memory_space<vmem>>, vector<8x128xf32>
      tpu.vector_store %arg6[%c0_18, %c0_19], %31 {strides = array<i32>} : memref<8x128xf32, #tpu.memory_space<vmem>>, vector<8x128xf32>,
    } else {
    }
    return
  }
  func.func @transform_0(%arg0: i32, %arg1: i32, %arg2: i32) -> (i32, i32) {
    %c0_i32 = arith.constant 0 : i32
    return %arg0, %arg2 : i32, i32
  }
  func.func @transform_1(%arg0: i32, %arg1: i32, %arg2: i32) -> (i32, i32) {
    %c0_i32 = arith.constant 0 : i32
    return %arg2, %arg1 : i32, i32
  }
  func.func @transform_2(%arg0: i32, %arg1: i32, %arg2: i32) -> (i32, i32) {
    %c0_i32 = arith.constant 0 : i32
    return %arg0, %arg1 : i32, i32
  }
  func.func @transform_3(%arg0: i32, %arg1: i32, %arg2: i32) -> (i32, i32) {
    %c0_i32 = arith.constant 0 : i32
    return %arg0, %arg1 : i32, i32
  }
}

module attributes {stable_mosaic.version = 11 : i64} {
  func.func @_bn_apply_kernel(%arg0: i32, %arg1: memref<512x128xbf16, #tpu.memory_space<vmem>>, %arg2: memref<1x128xf32, #tpu.memory_space<vmem>>, %arg3: memref<1x128xf32, #tpu.memory_space<vmem>>, %arg4: memref<512x128xbf16, #tpu.memory_space<vmem>>) attributes {dimension_semantics = [#tpu.dimension_semantics<parallel>], iteration_bounds = array<i64: 1>, scalar_prefetch = 0 : i64, scratch_operands = 0 : i64, tpu.core_type = #tpu.core_type<tc>, window_params = [{transform_indices = @transform_0, window_bounds = array<i64: 512, 128>}, {pipeline_mode = #tpu.pipeline_mode<synchronous>, transform_indices = @transform_1, window_bounds = array<i64: 1, 128>}, {pipeline_mode = #tpu.pipeline_mode<synchronous>, transform_indices = @transform_2, window_bounds = array<i64: 1, 128>}, {transform_indices = @transform_3, window_bounds = array<i64: 512, 128>}]} {
    %c0 = arith.constant 0 : index
    %c0_0 = arith.constant 0 : index
    %0 = vector.load %arg1[%c0, %c0_0] : memref<512x128xbf16, #tpu.memory_space<vmem>>, vector<512x128xbf16>
    %1 = arith.extf %0 : vector<512x128xbf16> to vector<512x128xf32>
    %c0_1 = arith.constant 0 : index
    %c0_2 = arith.constant 0 : index
    %2 = vector.load %arg2[%c0_1, %c0_2] : memref<1x128xf32, #tpu.memory_space<vmem>>, vector<1x128xf32>
    %3 = vector.broadcast %2 : vector<1x128xf32> to vector<512x128xf32>
    %4 = arith.mulf %1, %3 : vector<512x128xf32>
    %c0_3 = arith.constant 0 : index
    %c0_4 = arith.constant 0 : index
    %5 = vector.load %arg3[%c0_3, %c0_4] : memref<1x128xf32, #tpu.memory_space<vmem>>, vector<1x128xf32>
    %6 = vector.broadcast %5 : vector<1x128xf32> to vector<512x128xf32>
    %7 = arith.addf %4, %6 : vector<512x128xf32>
    %cst = arith.constant 0.000000e+00 : f32
    %8 = vector.broadcast %cst : f32 to vector<512x128xf32>
    %9 = arith.maximumf %7, %8 : vector<512x128xf32>
    %10 = arith.truncf %9 : vector<512x128xf32> to vector<512x128xbf16>
    %c0_5 = arith.constant 0 : index
    %c0_6 = arith.constant 0 : index
    %11 = vector.load %arg4[%c0_5, %c0_6] : memref<512x128xbf16, #tpu.memory_space<vmem>>, vector<512x128xbf16>
    tpu.vector_store %arg4[%c0_5, %c0_6], %10 {strides = array<i32>} : memref<512x128xbf16, #tpu.memory_space<vmem>>, vector<512x128xbf16>,
    return
  }
  func.func @transform_0(%arg0: i32) -> (i32, i32) {
    %c0_i32 = arith.constant 0 : i32
    %c0_i32_0 = arith.constant 0 : i32
    return %arg0, %c0_i32 : i32, i32
  }
  func.func @transform_1(%arg0: i32) -> (i32, i32) {
    %c0_i32 = arith.constant 0 : i32
    %c0_i32_0 = arith.constant 0 : i32
    %c0_i32_1 = arith.constant 0 : i32
    return %c0_i32, %c0_i32_0 : i32, i32
  }
  func.func @transform_2(%arg0: i32) -> (i32, i32) {
    %c0_i32 = arith.constant 0 : i32
    %c0_i32_0 = arith.constant 0 : i32
    %c0_i32_1 = arith.constant 0 : i32
    return %c0_i32, %c0_i32_0 : i32, i32
  }
  func.func @transform_3(%arg0: i32) -> (i32, i32) {
    %c0_i32 = arith.constant 0 : i32
    %c0_i32_0 = arith.constant 0 : i32
    return %arg0, %c0_i32 : i32, i32
  }
}

module attributes {stable_mosaic.version = 11 : i64} {
  func.func @_bn_apply_kernel(%arg0: i32, %arg1: memref<512x128xbf16, #tpu.memory_space<vmem>>, %arg2: memref<1x128xf32, #tpu.memory_space<vmem>>, %arg3: memref<1x128xf32, #tpu.memory_space<vmem>>, %arg4: memref<512x128xbf16, #tpu.memory_space<vmem>>, %arg5: memref<512x128xf32, #tpu.memory_space<vmem>>) attributes {dimension_semantics = [#tpu.dimension_semantics<parallel>], iteration_bounds = array<i64: 1>, scalar_prefetch = 0 : i64, scratch_operands = 0 : i64, tpu.core_type = #tpu.core_type<tc>, window_params = [{transform_indices = @transform_0, window_bounds = array<i64: 512, 128>}, {pipeline_mode = #tpu.pipeline_mode<synchronous>, transform_indices = @transform_1, window_bounds = array<i64: 1, 128>}, {pipeline_mode = #tpu.pipeline_mode<synchronous>, transform_indices = @transform_2, window_bounds = array<i64: 1, 128>}, {transform_indices = @transform_3, window_bounds = array<i64: 512, 128>}, {transform_indices = @transform_4, window_bounds = array<i64: 512, 128>}]} {
    %c0 = arith.constant 0 : index
    %c0_0 = arith.constant 0 : index
    %0 = vector.load %arg1[%c0, %c0_0] : memref<512x128xbf16, #tpu.memory_space<vmem>>, vector<512x128xbf16>
    %1 = arith.extf %0 : vector<512x128xbf16> to vector<512x128xf32>
    %c0_1 = arith.constant 0 : index
    %c0_2 = arith.constant 0 : index
    %2 = vector.load %arg2[%c0_1, %c0_2] : memref<1x128xf32, #tpu.memory_space<vmem>>, vector<1x128xf32>
    %3 = vector.broadcast %2 : vector<1x128xf32> to vector<512x128xf32>
    %4 = arith.mulf %1, %3 : vector<512x128xf32>
    %c0_3 = arith.constant 0 : index
    %c0_4 = arith.constant 0 : index
    %5 = vector.load %arg3[%c0_3, %c0_4] : memref<1x128xf32, #tpu.memory_space<vmem>>, vector<1x128xf32>
    %6 = vector.broadcast %5 : vector<1x128xf32> to vector<512x128xf32>
    %7 = arith.addf %4, %6 : vector<512x128xf32>
    %c0_5 = arith.constant 0 : index
    %c0_6 = arith.constant 0 : index
    %8 = vector.load %arg4[%c0_5, %c0_6] : memref<512x128xbf16, #tpu.memory_space<vmem>>, vector<512x128xbf16>
    %9 = arith.extf %8 : vector<512x128xbf16> to vector<512x128xf32>
    %10 = arith.addf %7, %9 : vector<512x128xf32>
    %cst = arith.constant 0.000000e+00 : f32
    %11 = vector.broadcast %cst : f32 to vector<512x128xf32>
    %12 = arith.maximumf %10, %11 : vector<512x128xf32>
    %c0_7 = arith.constant 0 : index
    %c0_8 = arith.constant 0 : index
    %13 = vector.load %arg5[%c0_7, %c0_8] : memref<512x128xf32, #tpu.memory_space<vmem>>, vector<512x128xf32>
    tpu.vector_store %arg5[%c0_7, %c0_8], %12 {strides = array<i32>} : memref<512x128xf32, #tpu.memory_space<vmem>>, vector<512x128xf32>,
    return
  }
  func.func @transform_0(%arg0: i32) -> (i32, i32) {
    %c0_i32 = arith.constant 0 : i32
    %c0_i32_0 = arith.constant 0 : i32
    return %arg0, %c0_i32 : i32, i32
  }
  func.func @transform_1(%arg0: i32) -> (i32, i32) {
    %c0_i32 = arith.constant 0 : i32
    %c0_i32_0 = arith.constant 0 : i32
    %c0_i32_1 = arith.constant 0 : i32
    return %c0_i32, %c0_i32_0 : i32, i32
  }
  func.func @transform_2(%arg0: i32) -> (i32, i32) {
    %c0_i32 = arith.constant 0 : i32
    %c0_i32_0 = arith.constant 0 : i32
    %c0_i32_1 = arith.constant 0 : i32
    return %c0_i32, %c0_i32_0 : i32, i32
  }
  func.func @transform_3(%arg0: i32) -> (i32, i32) {
    %c0_i32 = arith.constant 0 : i32
    %c0_i32_0 = arith.constant 0 : i32
    return %arg0, %c0_i32 : i32, i32
  }
  func.func @transform_4(%arg0: i32) -> (i32, i32) {
    %c0_i32 = arith.constant 0 : i32
    %c0_i32_0 = arith.constant 0 : i32
    return %arg0, %c0_i32 : i32, i32
  }
}

</mosaic_0001>

<llo_original>
// kernel: basic_block_forward.5
$region0: #{basic_block_forward.5}
  #allocation0 [shape = 'u32[]', space=smem, size = 0x4, offset = 0x4, fixed_abs, tag = 'smem constant byte address 0x4 - core index']
  #allocation1 [shape = 'u32[144,128]{1,0:T(1,128)}', space=vmem, size = 0x12000, scoped, tag = 'internal scratch']
  %s0 = inlined_call_operand.vmem [shape: bf16[512,128], index: 0, kind: input, shape index: {}]
  %s1 = inlined_call_operand.vmem [shape: f32[1,128], index: 1, kind: input, shape index: {}]
  %s2 = inlined_call_operand.vmem [shape: f32[1,128], index: 2, kind: input, shape index: {}]
  %s3 = inlined_call_operand.vmem [shape: bf16[512,128], index: 3, kind: output, shape index: {}]
  %s4 = sld [smem:[#allocation0]]
  $region22: #{basic_block_forward.5} parent=0
    _
  %s6 = ssub.s32 1, %s4
  %s7 = scalar_select 0, %s6, %s4
  // Predicated region
  $region2: #{basic_block_forward.5} parent=0 // pred_check
    _
  $region3: #{basic_block_forward.5} parent=0 // pred_check_branch
    %9 = sbr.rel (0) target = $region5
  $region4: #{basic_block_forward.5} parent=0 // pred_region
    _
  $region5: #{basic_block_forward.5} parent=0 // pred_fallthru
    _
  // Predicated region
  $region6: #{basic_block_forward.5} parent=0 // pred_check
    _
  $region7: #{basic_block_forward.5} parent=0 // pred_check_branch
    %11 = sbr.rel (0) target = $region9
  $region8: #{basic_block_forward.5} parent=0 // pred_region
    _
  $region9: #{basic_block_forward.5} parent=0 // pred_fallthru
    _
  // Predicated region
  $region10: #{basic_block_forward.5} parent=0 // pred_check
    _
  $region11: #{basic_block_forward.5} parent=0 // pred_check_branch
    %13 = sbr.rel (0) target = $region13
  $region12: #{basic_block_forward.5} parent=0 // pred_region
    _
  $region13: #{basic_block_forward.5} parent=0 // pred_fallthru
    _
  %v14 = vld [vmem:[%s0] sm:$0xf]
  %v15 = vld [vmem:[%s0 + $0x4] sm:$0xf]
  %v16 = vld [vmem:[%s0 + $0x8] sm:$0xf]
  %v17 = vld [vmem:[%s0 + $0xc] sm:$0xf]
  %v18 = vld [vmem:[%s0 + $0x10] sm:$0xf]
  %v19 = vld [vmem:[%s0 + $0x14] sm:$0xf]
  %v20 = vld [vmem:[%s0 + $0x18] sm:$0xf]
  %v21 = vld [vmem:[%s0 + $0x1c] sm:$0xf]
  %v22 = vld [vmem:[%s0 + $0x20] sm:$0xf]
  %v23 = vld [vmem:[%s0 + $0x24] sm:$0xf]
  %v24 = vld [vmem:[%s0 + $0x28] sm:$0xf]
  %v25 = vld [vmem:[%s0 + $0x2c] sm:$0xf]
  %v26 = vld [vmem:[%s0 + $0x30] sm:$0xf]
  %v27 = vld [vmem:[%s0 + $0x34] sm:$0xf]
  %v28 = vld [vmem:[%s0 + $0x38] sm:$0xf]
  %v29 = vld [vmem:[%s0 + $0x3c] sm:$0xf]
  %v30 = vld [vmem:[%s0 + $0x40] sm:$0xf]
  %v31 = vld [vmem:[%s0 + $0x44] sm:$0xf]
  %v32 = vld [vmem:[%s0 + $0x48] sm:$0xf]
  %v33 = vld [vmem:[%s0 + $0x4c] sm:$0xf]
  %v34 = vld [vmem:[%s0 + $0x50] sm:$0xf]
  %v35 = vld [vmem:[%s0 + $0x54] sm:$0xf]
  %v36 = vld [vmem:[%s0 + $0x58] sm:$0xf]
  %v37 = vld [vmem:[%s0 + $0x5c] sm:$0xf]
  %v38 = vld [vmem:[%s0 + $0x60] sm:$0xf]
  %v39 = vld [vmem:[%s0 + $0x64] sm:$0xf]
  %v40 = vld [vmem:[%s0 + $0x68] sm:$0xf]
  %v41 = vld [vmem:[%s0 + $0x6c] sm:$0xf]
  %v42 = vld [vmem:[%s0 + $0x70] sm:$0xf]
  %v43 = vld [vmem:[%s0 + $0x74] sm:$0xf]
  %v44 = vld [vmem:[%s0 + $0x78] sm:$0xf]
  %v45 = vld [vmem:[%s0 + $0x7c] sm:$0xf]
  %v46 = vld [vmem:[%s0 + $0x80] sm:$0xf]
  %v47 = vld [vmem:[%s0 + $0x84] sm:$0xf]
  %v48 = vld [vmem:[%s0 + $0x88] sm:$0xf]
  %v49 = vld [vmem:[%s0 + $0x8c] sm:$0xf]
  %v50 = vld [vmem:[%s0 + $0x90] sm:$0xf]
  %v51 = vld [vmem:[%s0 + $0x94] sm:$0xf]
  %v52 = vld [vmem:[%s0 + $0x98] sm:$0xf]
  %v53 = vld [vmem:[%s0 + $0x9c] sm:$0xf]
  %v54 = vld [vmem:[%s0 + $0xa0] sm:$0xf]
  %v55 = vld [vmem:[%s0 + $0xa4] sm:$0xf]
  %v56 = vld [vmem:[%s0 + $0xa8] sm:$0xf]
  %v57 = vld [vmem:[%s0 + $0xac] sm:$0xf]
  %v58 = vld [vmem:[%s0 + $0xb0] sm:$0xf]
  %v59 = vld [vmem:[%s0 + $0xb4] sm:$0xf]
  %v60 = vld [vmem:[%s0 + $0xb8] sm:$0xf]
  %v61 = vld [vmem:[%s0 + $0xbc] sm:$0xf]
  %v62 = vld [vmem:[%s0 + $0xc0] sm:$0xf]
  %v63 = vld [vmem:[%s0 + $0xc4] sm:$0xf]
  %v64 = vld [vmem:[%s0 + $0xc8] sm:$0xf]
  %v65 = vld [vmem:[%s0 + $0xcc] sm:$0xf]
  %v66 = vld [vmem:[%s0 + $0xd0] sm:$0xf]
  %v67 = vld [vmem:[%s0 + $0xd4] sm:$0xf]
  %v68 = vld [vmem:[%s0 + $0xd8] sm:$0xf]
  %v69 = vld [vmem:[%s0 + $0xdc] sm:$0xf]
  %v70 = vld [vmem:[%s0 + $0xe0] sm:$0xf]
  %v71 = vld [vmem:[%s0 + $0xe4] sm:$0xf]
  %v72 = vld [vmem:[%s0 + $0xe8] sm:$0xf]
  %v73 = vld [vmem:[%s0 + $0xec] sm:$0xf]
  %v74 = vld [vmem:[%s0 + $0xf0] sm:$0xf]
  %v75 = vld [vmem:[%s0 + $0xf4] sm:$0xf]
  %v76 = vld [vmem:[%s0 + $0xf8] sm:$0xf]
  %v77 = vld [vmem:[%s0 + $0xfc] sm:$0xf]
  %v78 = vunpack.c.l.bf16 %v14
  %v79 = vunpack.c.l.bf16 %v15
  %v80 = vunpack.c.l.bf16 %v16
  %v81 = vunpack.c.l.bf16 %v17
  %v82 = vunpack.c.l.bf16 %v18
  %v83 = vunpack.c.l.bf16 %v19
  %v84 = vunpack.c.l.bf16 %v20
  %v85 = vunpack.c.l.bf16 %v21
  %v86 = vunpack.c.l.bf16 %v22
  %v87 = vunpack.c.l.bf16 %v23
  %v88 = vunpack.c.l.bf16 %v24
  %v89 = vunpack.c.l.bf16 %v25
  %v90 = vunpack.c.l.bf16 %v26
  %v91 = vunpack.c.l.bf16 %v27
  %v92 = vunpack.c.l.bf16 %v28
  %v93 = vunpack.c.l.bf16 %v29
  %v94 = vunpack.c.l.bf16 %v30
  %v95 = vunpack.c.l.bf16 %v31
  %v96 = vunpack.c.l.bf16 %v32
  %v97 = vunpack.c.l.bf16 %v33
  %v98 = vunpack.c.l.bf16 %v34
  %v99 = vunpack.c.l.bf16 %v35
  %v100 = vunpack.c.l.bf16 %v36
  %v101 = vunpack.c.l.bf16 %v37
  %v102 = vunpack.c.l.bf16 %v38
  %v103 = vunpack.c.l.bf16 %v39
  %v104 = vunpack.c.l.bf16 %v40
  %v105 = vunpack.c.l.bf16 %v41
  %v106 = vunpack.c.l.bf16 %v42
  %v107 = vunpack.c.l.bf16 %v43
  %v108 = vunpack.c.l.bf16 %v44
  %v109 = vunpack.c.l.bf16 %v45
  %v110 = vunpack.c.l.bf16 %v46
  %v111 = vunpack.c.l.bf16 %v47
  %v112 = vunpack.c.l.bf16 %v48
  %v113 = vunpack.c.l.bf16 %v49
  %v114 = vunpack.c.l.bf16 %v50
  %v115 = vunpack.c.l.bf16 %v51
  %v116 = vunpack.c.l.bf16 %v52
  %v117 = vunpack.c.l.bf16 %v53
  %v118 = vunpack.c.l.bf16 %v54
  %v119 = vunpack.c.l.bf16 %v55
  %v120 = vunpack.c.l.bf16 %v56
  %v121 = vunpack.c.l.bf16 %v57
  %v122 = vunpack.c.l.bf16 %v58
  %v123 = vunpack.c.l.bf16 %v59
  %v124 = vunpack.c.l.bf16 %v60
  %v125 = vunpack.c.l.bf16 %v61
  %v126 = vunpack.c.l.bf16 %v62
  %v127 = vunpack.c.l.bf16 %v63
  %v128 = vunpack.c.l.bf16 %v64
  %v129 = vunpack.c.l.bf16 %v65
  %v130 = vunpack.c.l.bf16 %v66
  %v131 = vunpack.c.l.bf16 %v67
  %v132 = vunpack.c.l.bf16 %v68
  %v133 = vunpack.c.l.bf16 %v69
  %v134 = vunpack.c.l.bf16 %v70
  %v135 = vunpack.c.l.bf16 %v71
  %v136 = vunpack.c.l.bf16 %v72
  %v137 = vunpack.c.l.bf16 %v73
  %v138 = vunpack.c.l.bf16 %v74
  %v139 = vunpack.c.l.bf16 %v75
  %v140 = vunpack.c.l.bf16 %v76
  %v141 = vunpack.c.l.bf16 %v77
  %v142 = vld [vmem:[%s1] sm:$0x1]
  %v144 = vlaneseq
  %v145 = vshrl.u32 %v144, 7
  %v146 = vsub.s32 0, %v145
  %v147 = vrot.slane %v142, %v146
  %v149 = vmul.f32 %v78, %v147
  %v150 = vmul.f32 %v79, %v147
  %v151 = vmul.f32 %v80, %v147
  %v152 = vmul.f32 %v81, %v147
  %v153 = vmul.f32 %v82, %v147
  %v154 = vmul.f32 %v83, %v147
  %v155 = vmul.f32 %v84, %v147
  %v156 = vmul.f32 %v85, %v147
  %v157 = vmul.f32 %v86, %v147
  %v158 = vmul.f32 %v87, %v147
  %v159 = vmul.f32 %v88, %v147
  %v160 = vmul.f32 %v89, %v147
  %v161 = vmul.f32 %v90, %v147
  %v162 = vmul.f32 %v91, %v147
  %v163 = vmul.f32 %v92, %v147
  %v164 = vmul.f32 %v93, %v147
  %v165 = vmul.f32 %v94, %v147
  %v166 = vmul.f32 %v95, %v147
  %v167 = vmul.f32 %v96, %v147
  %v168 = vmul.f32 %v97, %v147
  %v169 = vmul.f32 %v98, %v147
  %v170 = vmul.f32 %v99, %v147
  %v171 = vmul.f32 %v100, %v147
  %v172 = vmul.f32 %v101, %v147
  %v173 = vmul.f32 %v102, %v147
  %v174 = vmul.f32 %v103, %v147
  %v175 = vmul.f32 %v104, %v147
  %v176 = vmul.f32 %v105, %v147
  %v177 = vmul.f32 %v106, %v147
  %v178 = vmul.f32 %v107, %v147
  %v179 = vmul.f32 %v108, %v147
  %v180 = vmul.f32 %v109, %v147
  %v181 = vmul.f32 %v110, %v147
  %v182 = vmul.f32 %v111, %v147
  %v183 = vmul.f32 %v112, %v147
  %v184 = vmul.f32 %v113, %v147
  %v185 = vmul.f32 %v114, %v147
  %v186 = vmul.f32 %v115, %v147
  %v187 = vmul.f32 %v116, %v147
  %v188 = vmul.f32 %v117, %v147
  %v189 = vmul.f32 %v118, %v147
  %v190 = vmul.f32 %v119, %v147
  %v191 = vmul.f32 %v120, %v147
  %v192 = vmul.f32 %v121, %v147
  %v193 = vmul.f32 %v122, %v147
  %v194 = vmul.f32 %v123, %v147
  %v195 = vmul.f32 %v124, %v147
  %v196 = vmul.f32 %v125, %v147
  %v197 = vmul.f32 %v126, %v147
  %v198 = vmul.f32 %v127, %v147
  %v199 = vmul.f32 %v128, %v147
  %v200 = vmul.f32 %v129, %v147
  %v201 = vmul.f32 %v130, %v147
  %v202 = vmul.f32 %v131, %v147
  %v203 = vmul.f32 %v132, %v147
  %v204 = vmul.f32 %v133, %v147
  %v205 = vmul.f32 %v134, %v147
  %v206 = vmul.f32 %v135, %v147
  %v207 = vmul.f32 %v136, %v147
  %v208 = vmul.f32 %v137, %v147
  %v209 = vmul.f32 %v138, %v147
  %v210 = vmul.f32 %v139, %v147
  %v211 = vmul.f32 %v140, %v147
  %v212 = vmul.f32 %v141, %v147
  %v213 = vld [vmem:[%s2] sm:$0x1]
  %v215 = vlaneseq
  %v216 = vshrl.u32 %v215, 7
  %v217 = vsub.s32 0, %v216
  %v218 = vrot.slane %v213, %v217
  %v220 = vadd.f32 %v149, %v218
  %v221 = vadd.f32 %v150, %v218
  %v222 = vadd.f32 %v151, %v218
  %v223 = vadd.f32 %v152, %v218
  %v224 = vadd.f32 %v153, %v218
  %v225 = vadd.f32 %v154, %v218
  %v226 = vadd.f32 %v155, %v218
  %v227 = vadd.f32 %v156, %v218
  %v228 = vadd.f32 %v157, %v218
  %v229 = vadd.f32 %v158, %v218
  %v230 = vadd.f32 %v159, %v218
  %v231 = vadd.f32 %v160, %v218
  %v232 = vadd.f32 %v161, %v218
  %v233 = vadd.f32 %v162, %v218
  %v234 = vadd.f32 %v163, %v218
  %v235 = vadd.f32 %v164, %v218
  %v236 = vadd.f32 %v165, %v218
  %v237 = vadd.f32 %v166, %v218
  %v238 = vadd.f32 %v167, %v218
  %v239 = vadd.f32 %v168, %v218
  %v240 = vadd.f32 %v169, %v218
  %v241 = vadd.f32 %v170, %v218
  %v242 = vadd.f32 %v171, %v218
  %v243 = vadd.f32 %v172, %v218
  %v244 = vadd.f32 %v173, %v218
  %v245 = vadd.f32 %v174, %v218
  %v246 = vadd.f32 %v175, %v218
  %v247 = vadd.f32 %v176, %v218
  %v248 = vadd.f32 %v177, %v218
  %v249 = vadd.f32 %v178, %v218
  %v250 = vadd.f32 %v179, %v218
  %v251 = vadd.f32 %v180, %v218
  %v252 = vadd.f32 %v181, %v218
  %v253 = vadd.f32 %v182, %v218
  %v254 = vadd.f32 %v183, %v218
  %v255 = vadd.f32 %v184, %v218
  %v256 = vadd.f32 %v185, %v218
  %v257 = vadd.f32 %v186, %v218
  %v258 = vadd.f32 %v187, %v218
  %v259 = vadd.f32 %v188, %v218
  %v260 = vadd.f32 %v189, %v218
  %v261 = vadd.f32 %v190, %v218
  %v262 = vadd.f32 %v191, %v218
  %v263 = vadd.f32 %v192, %v218
  %v264 = vadd.f32 %v193, %v218
  %v265 = vadd.f32 %v194, %v218
  %v266 = vadd.f32 %v195, %v218
  %v267 = vadd.f32 %v196, %v218
  %v268 = vadd.f32 %v197, %v218
  %v269 = vadd.f32 %v198, %v218
  %v270 = vadd.f32 %v199, %v218
  %v271 = vadd.f32 %v200, %v218
  %v272 = vadd.f32 %v201, %v218
  %v273 = vadd.f32 %v202, %v218
  %v274 = vadd.f32 %v203, %v218
  %v275 = vadd.f32 %v204, %v218
  %v276 = vadd.f32 %v205, %v218
  %v277 = vadd.f32 %v206, %v218
  %v278 = vadd.f32 %v207, %v218
  %v279 = vadd.f32 %v208, %v218
  %v280 = vadd.f32 %v209, %v218
  %v281 = vadd.f32 %v210, %v218
  %v282 = vadd.f32 %v211, %v218
  %v283 = vadd.f32 %v212, %v218
  %v284 = vmax.f32 %v220, 0.0
  %v285 = vmax.f32 %v221, 0.0
  %v286 = vmax.f32 %v222, 0.0
  %v287 = vmax.f32 %v223, 0.0
  %v288 = vmax.f32 %v224, 0.0
  %v289 = vmax.f32 %v225, 0.0
  %v290 = vmax.f32 %v226, 0.0
  %v291 = vmax.f32 %v227, 0.0
  %v292 = vmax.f32 %v228, 0.0
  %v293 = vmax.f32 %v229, 0.0
  %v294 = vmax.f32 %v230, 0.0
  %v295 = vmax.f32 %v231, 0.0
  %v296 = vmax.f32 %v232, 0.0
  %v297 = vmax.f32 %v233, 0.0
  %v298 = vmax.f32 %v234, 0.0
  %v299 = vmax.f32 %v235, 0.0
  %v300 = vmax.f32 %v236, 0.0
  %v301 = vmax.f32 %v237, 0.0
  %v302 = vmax.f32 %v238, 0.0
  %v303 = vmax.f32 %v239, 0.0
  %v304 = vmax.f32 %v240, 0.0
  %v305 = vmax.f32 %v241, 0.0
  %v306 = vmax.f32 %v242, 0.0
  %v307 = vmax.f32 %v243, 0.0
  %v308 = vmax.f32 %v244, 0.0
  %v309 = vmax.f32 %v245, 0.0
  %v310 = vmax.f32 %v246, 0.0
  %v311 = vmax.f32 %v247, 0.0
  %v312 = vmax.f32 %v248, 0.0
  %v313 = vmax.f32 %v249, 0.0
  %v314 = vmax.f32 %v250, 0.0
  %v315 = vmax.f32 %v251, 0.0
  %v316 = vmax.f32 %v252, 0.0
  %v317 = vmax.f32 %v253, 0.0
  %v318 = vmax.f32 %v254, 0.0
  %v319 = vmax.f32 %v255, 0.0
  %v320 = vmax.f32 %v256, 0.0
  %v321 = vmax.f32 %v257, 0.0
  %v322 = vmax.f32 %v258, 0.0
  %v323 = vmax.f32 %v259, 0.0
  %v324 = vmax.f32 %v260, 0.0
  %v325 = vmax.f32 %v261, 0.0
  %v326 = vmax.f32 %v262, 0.0
  %v327 = vmax.f32 %v263, 0.0
  %v328 = vmax.f32 %v264, 0.0
  %v329 = vmax.f32 %v265, 0.0
  %v330 = vmax.f32 %v266, 0.0
  %v331 = vmax.f32 %v267, 0.0
  %v332 = vmax.f32 %v268, 0.0
  %v333 = vmax.f32 %v269, 0.0
  %v334 = vmax.f32 %v270, 0.0
  %v335 = vmax.f32 %v271, 0.0
  %v336 = vmax.f32 %v272, 0.0
  %v337 = vmax.f32 %v273, 0.0
  %v338 = vmax.f32 %v274, 0.0
  %v339 = vmax.f32 %v275, 0.0
  %v340 = vmax.f32 %v276, 0.0
  %v341 = vmax.f32 %v277, 0.0
  %v342 = vmax.f32 %v278, 0.0
  %v343 = vmax.f32 %v279, 0.0
  %v344 = vmax.f32 %v280, 0.0
  %v345 = vmax.f32 %v281, 0.0
  %v346 = vmax.f32 %v282, 0.0
  %v347 = vmax.f32 %v283, 0.0
  %v348 = vpack.c.bf16 %v285, %v284
  %v349 = vpack.c.bf16 %v287, %v286
  %v350 = vpack.c.bf16 %v289, %v288
  %v351 = vpack.c.bf16 %v291, %v290
  %v352 = vpack.c.bf16 %v293, %v292
  %v353 = vpack.c.bf16 %v295, %v294
  %v354 = vpack.c.bf16 %v297, %v296
  %v355 = vpack.c.bf16 %v299, %v298
  %v356 = vpack.c.bf16 %v301, %v300
  %v357 = vpack.c.bf16 %v303, %v302
  %v358 = vpack.c.bf16 %v305, %v304
  %v359 = vpack.c.bf16 %v307, %v306
  %v360 = vpack.c.bf16 %v309, %v308
  %v361 = vpack.c.bf16 %v311, %v310
  %v362 = vpack.c.bf16 %v313, %v312
  %v363 = vpack.c.bf16 %v315, %v314
  %v364 = vpack.c.bf16 %v317, %v316
  %v365 = vpack.c.bf16 %v319, %v318
  %v366 = vpack.c.bf16 %v321, %v320
  %v367 = vpack.c.bf16 %v323, %v322
  %v368 = vpack.c.bf16 %v325, %v324
  %v369 = vpack.c.bf16 %v327, %v326
  %v370 = vpack.c.bf16 %v329, %v328
  %v371 = vpack.c.bf16 %v331, %v330
  %v372 = vpack.c.bf16 %v333, %v332
  %v373 = vpack.c.bf16 %v335, %v334
  %v374 = vpack.c.bf16 %v337, %v336
  %v375 = vpack.c.bf16 %v339, %v338
  %v376 = vpack.c.bf16 %v341, %v340
  %v377 = vpack.c.bf16 %v343, %v342
  %v378 = vpack.c.bf16 %v345, %v344
  %v379 = vpack.c.bf16 %v347, %v346
  %v412 = vunpack.c.l.b16 %v348
  %v413 = vunpack.c.h.b16 %v348
  %v414 = vunpack.c.l.b16 %v349
  %v415 = vunpack.c.h.b16 %v349
  %v416 = vunpack.c.l.b16 %v350
  %v417 = vunpack.c.h.b16 %v350
  %v418 = vunpack.c.l.b16 %v351
  %v419 = vunpack.c.h.b16 %v351
  %v420 = vunpack.c.l.b16 %v352
  %v421 = vunpack.c.h.b16 %v352
  %v422 = vunpack.c.l.b16 %v353
  %v423 = vunpack.c.h.b16 %v353
  %v424 = vunpack.c.l.b16 %v354
  %v425 = vunpack.c.h.b16 %v354
  %v426 = vunpack.c.l.b16 %v355
  %v427 = vunpack.c.h.b16 %v355
  %v428 = vunpack.c.l.b16 %v356
  %v429 = vunpack.c.h.b16 %v356
  %v430 = vunpack.c.l.b16 %v357
  %v431 = vunpack.c.h.b16 %v357
  %v432 = vunpack.c.l.b16 %v358
  %v433 = vunpack.c.h.b16 %v358
  %v434 = vunpack.c.l.b16 %v359
  %v435 = vunpack.c.h.b16 %v359
  %v436 = vunpack.c.l.b16 %v360
  %v437 = vunpack.c.h.b16 %v360
  %v438 = vunpack.c.l.b16 %v361
  %v439 = vunpack.c.h.b16 %v361
  %v440 = vunpack.c.l.b16 %v362
  %v441 = vunpack.c.h.b16 %v362
  %v442 = vunpack.c.l.b16 %v363
  %v443 = vunpack.c.h.b16 %v363
  %v444 = vunpack.c.l.b16 %v364
  %v445 = vunpack.c.h.b16 %v364
  %v446 = vunpack.c.l.b16 %v365
  %v447 = vunpack.c.h.b16 %v365
  %v448 = vunpack.c.l.b16 %v366
  %v449 = vunpack.c.h.b16 %v366
  %v450 = vunpack.c.l.b16 %v367
  %v451 = vunpack.c.h.b16 %v367
  %v452 = vunpack.c.l.b16 %v368
  %v453 = vunpack.c.h.b16 %v368
  %v454 = vunpack.c.l.b16 %v369
  %v455 = vunpack.c.h.b16 %v369
  %v456 = vunpack.c.l.b16 %v370
  %v457 = vunpack.c.h.b16 %v370
  %v458 = vunpack.c.l.b16 %v371
  %v459 = vunpack.c.h.b16 %v371
  %v460 = vunpack.c.l.b16 %v372
  %v461 = vunpack.c.h.b16 %v372
  %v462 = vunpack.c.l.b16 %v373
  %v463 = vunpack.c.h.b16 %v373
  %v464 = vunpack.c.l.b16 %v374
  %v465 = vunpack.c.h.b16 %v374
  %v466 = vunpack.c.l.b16 %v375
  %v467 = vunpack.c.h.b16 %v375
  %v468 = vunpack.c.l.b16 %v376
  %v469 = vunpack.c.h.b16 %v376
  %v470 = vunpack.c.l.b16 %v377
  %v471 = vunpack.c.h.b16 %v377
  %v472 = vunpack.c.l.b16 %v378
  %v473 = vunpack.c.h.b16 %v378
  %v474 = vunpack.c.l.b16 %v379
  %v475 = vunpack.c.h.b16 %v379
  %v476 = vpack.c.b16 %v412, %v412
  %v477 = vpack.c.b16 %v413, %v413
  %v478 = vpack.c.b16 %v414, %v414
  %v479 = vpack.c.b16 %v415, %v415
  %v480 = vpack.c.b16 %v416, %v416
  %v481 = vpack.c.b16 %v417, %v417
  %v482 = vpack.c.b16 %v418, %v418
  %v483 = vpack.c.b16 %v419, %v419
  %v484 = vpack.c.b16 %v420, %v420
  %v485 = vpack.c.b16 %v421, %v421
  %v486 = vpack.c.b16 %v422, %v422
  %v487 = vpack.c.b16 %v423, %v423
  %v488 = vpack.c.b16 %v424, %v424
  %v489 = vpack.c.b16 %v425, %v425
  %v490 = vpack.c.b16 %v426, %v426
  %v491 = vpack.c.b16 %v427, %v427
  %v492 = vpack.c.b16 %v428, %v428
  %v493 = vpack.c.b16 %v429, %v429
  %v494 = vpack.c.b16 %v430, %v430
  %v495 = vpack.c.b16 %v431, %v431
  %v496 = vpack.c.b16 %v432, %v432
  %v497 = vpack.c.b16 %v433, %v433
  %v498 = vpack.c.b16 %v434, %v434
  %v499 = vpack.c.b16 %v435, %v435
  %v500 = vpack.c.b16 %v436, %v436
  %v501 = vpack.c.b16 %v437, %v437
  %v502 = vpack.c.b16 %v438, %v438
  %v503 = vpack.c.b16 %v439, %v439
  %v504 = vpack.c.b16 %v440, %v440
  %v505 = vpack.c.b16 %v441, %v441
  %v506 = vpack.c.b16 %v442, %v442
  %v507 = vpack.c.b16 %v443, %v443
  %v508 = vpack.c.b16 %v444, %v444
  %v509 = vpack.c.b16 %v445, %v445
  %v510 = vpack.c.b16 %v446, %v446
  %v511 = vpack.c.b16 %v447, %v447
  %v512 = vpack.c.b16 %v448, %v448
  %v513 = vpack.c.b16 %v449, %v449
  %v514 = vpack.c.b16 %v450, %v450
  %v515 = vpack.c.b16 %v451, %v451
  %v516 = vpack.c.b16 %v452, %v452
  %v517 = vpack.c.b16 %v453, %v453
  %v518 = vpack.c.b16 %v454, %v454
  %v519 = vpack.c.b16 %v455, %v455
  %v520 = vpack.c.b16 %v456, %v456
  %v521 = vpack.c.b16 %v457, %v457
  %v522 = vpack.c.b16 %v458, %v458
  %v523 = vpack.c.b16 %v459, %v459
  %v524 = vpack.c.b16 %v460, %v460
  %v525 = vpack.c.b16 %v461, %v461
  %v526 = vpack.c.b16 %v462, %v462
  %v527 = vpack.c.b16 %v463, %v463
  %v528 = vpack.c.b16 %v464, %v464
  %v529 = vpack.c.b16 %v465, %v465
  %v530 = vpack.c.b16 %v466, %v466
  %v531 = vpack.c.b16 %v467, %v467
  %v532 = vpack.c.b16 %v468, %v468
  %v533 = vpack.c.b16 %v469, %v469
  %v534 = vpack.c.b16 %v470, %v470
  %v535 = vpack.c.b16 %v471, %v471
  %v536 = vpack.c.b16 %v472, %v472
  %v537 = vpack.c.b16 %v473, %v473
  %v538 = vpack.c.b16 %v474, %v474
  %v539 = vpack.c.b16 %v475, %v475
  %604 = vst [vmem:[%s3] sm:$0xf] %v476
  %605 = vst [vmem:[%s3 + $0x4] sm:$0xf] %v477
  %606 = vst [vmem:[%s3 + $0x8] sm:$0xf] %v478
  %607 = vst [vmem:[%s3 + $0xc] sm:$0xf] %v479
  %608 = vst [vmem:[%s3 + $0x10] sm:$0xf] %v480
  %609 = vst [vmem:[%s3 + $0x14] sm:$0xf] %v481
  %610 = vst [vmem:[%s3 + $0x18] sm:$0xf] %v482
  %611 = vst [vmem:[%s3 + $0x1c] sm:$0xf] %v483
  %612 = vst [vmem:[%s3 + $0x20] sm:$0xf] %v484
  %613 = vst [vmem:[%s3 + $0x24] sm:$0xf] %v485
  %614 = vst [vmem:[%s3 + $0x28] sm:$0xf] %v486
  %615 = vst [vmem:[%s3 + $0x2c] sm:$0xf] %v487
  %616 = vst [vmem:[%s3 + $0x30] sm:$0xf] %v488
  %617 = vst [vmem:[%s3 + $0x34] sm:$0xf] %v489
  %618 = vst [vmem:[%s3 + $0x38] sm:$0xf] %v490
  %619 = vst [vmem:[%s3 + $0x3c] sm:$0xf] %v491
  %620 = vst [vmem:[%s3 + $0x40] sm:$0xf] %v492
  %621 = vst [vmem:[%s3 + $0x44] sm:$0xf] %v493
  %622 = vst [vmem:[%s3 + $0x48] sm:$0xf] %v494
  %623 = vst [vmem:[%s3 + $0x4c] sm:$0xf] %v495
  %624 = vst [vmem:[%s3 + $0x50] sm:$0xf] %v496
  %625 = vst [vmem:[%s3 + $0x54] sm:$0xf] %v497
  %626 = vst [vmem:[%s3 + $0x58] sm:$0xf] %v498
  %627 = vst [vmem:[%s3 + $0x5c] sm:$0xf] %v499
  %628 = vst [vmem:[%s3 + $0x60] sm:$0xf] %v500
  %629 = vst [vmem:[%s3 + $0x64] sm:$0xf] %v501
  %630 = vst [vmem:[%s3 + $0x68] sm:$0xf] %v502
  %631 = vst [vmem:[%s3 + $0x6c] sm:$0xf] %v503
  %632 = vst [vmem:[%s3 + $0x70] sm:$0xf] %v504
  %633 = vst [vmem:[%s3 + $0x74] sm:$0xf] %v505
  %634 = vst [vmem:[%s3 + $0x78] sm:$0xf] %v506
  %635 = vst [vmem:[%s3 + $0x7c] sm:$0xf] %v507
  %636 = vst [vmem:[%s3 + $0x80] sm:$0xf] %v508
  %637 = vst [vmem:[%s3 + $0x84] sm:$0xf] %v509
  %638 = vst [vmem:[%s3 + $0x88] sm:$0xf] %v510
  %639 = vst [vmem:[%s3 + $0x8c] sm:$0xf] %v511
  %640 = vst [vmem:[%s3 + $0x90] sm:$0xf] %v512
  %641 = vst [vmem:[%s3 + $0x94] sm:$0xf] %v513
  %642 = vst [vmem:[%s3 + $0x98] sm:$0xf] %v514
  %643 = vst [vmem:[%s3 + $0x9c] sm:$0xf] %v515
  %644 = vst [vmem:[%s3 + $0xa0] sm:$0xf] %v516
  %645 = vst [vmem:[%s3 + $0xa4] sm:$0xf] %v517
  %646 = vst [vmem:[%s3 + $0xa8] sm:$0xf] %v518
  %647 = vst [vmem:[%s3 + $0xac] sm:$0xf] %v519
  %648 = vst [vmem:[%s3 + $0xb0] sm:$0xf] %v520
  %649 = vst [vmem:[%s3 + $0xb4] sm:$0xf] %v521
  %650 = vst [vmem:[%s3 + $0xb8] sm:$0xf] %v522
  %651 = vst [vmem:[%s3 + $0xbc] sm:$0xf] %v523
  %652 = vst [vmem:[%s3 + $0xc0] sm:$0xf] %v524
  %653 = vst [vmem:[%s3 + $0xc4] sm:$0xf] %v525
  %654 = vst [vmem:[%s3 + $0xc8] sm:$0xf] %v526
  %655 = vst [vmem:[%s3 + $0xcc] sm:$0xf] %v527
  %656 = vst [vmem:[%s3 + $0xd0] sm:$0xf] %v528
  %657 = vst [vmem:[%s3 + $0xd4] sm:$0xf] %v529
  %658 = vst [vmem:[%s3 + $0xd8] sm:$0xf] %v530
  %659 = vst [vmem:[%s3 + $0xdc] sm:$0xf] %v531
  %660 = vst [vmem:[%s3 + $0xe0] sm:$0xf] %v532
  %661 = vst [vmem:[%s3 + $0xe4] sm:$0xf] %v533
  %662 = vst [vmem:[%s3 + $0xe8] sm:$0xf] %v534
  %663 = vst [vmem:[%s3 + $0xec] sm:$0xf] %v535
  %664 = vst [vmem:[%s3 + $0xf0] sm:$0xf] %v536
  %665 = vst [vmem:[%s3 + $0xf4] sm:$0xf] %v537
  %666 = vst [vmem:[%s3 + $0xf8] sm:$0xf] %v538
  %667 = vst [vmem:[%s3 + $0xfc] sm:$0xf] %v539
  // Predicated region
  $region14: #{basic_block_forward.5} parent=0 // pred_check
    _
  $region15: #{basic_block_forward.5} parent=0 // pred_check_branch
    %669 = sbr.rel (0) target = $region17
  $region16: #{basic_block_forward.5} parent=0 // pred_region
    _
  $region17: #{basic_block_forward.5} parent=0 // pred_fallthru
    _
  // Predicated region
  $region18: #{basic_block_forward.5} parent=0 // pred_check
    _
  $region19: #{basic_block_forward.5} parent=0 // pred_check_branch
    %671 = sbr.rel (0) target = $region21
  $region20: #{basic_block_forward.5} parent=0 // pred_region
    _
  $region21: #{basic_block_forward.5} parent=0 // pred_fallthru
    _

// kernel: basic_block_forward.4
$region0: #{basic_block_forward.4}
  #allocation0 [shape = 'u32[]', space=smem, size = 0x4, offset = 0x4, fixed_abs, tag = 'smem constant byte address 0x4 - core index']
  #allocation1 [shape = 'u32[144,128]{1,0:T(1,128)}', space=vmem, size = 0x12000, scoped, tag = 'internal scratch']
  #allocation2 [shape = 'f32[512,128]{1,0:T(8,128)}', space=vmem, size = 0x40000, scoped, tag = 'scratch operand']
  %s0 = inlined_call_operand.vmem [shape: bf16[512,128], index: 0, kind: input, shape index: {}]
  %s1 = inlined_call_operand.vmem [shape: bf16[128,128], index: 1, kind: input, shape index: {}]
  %s2 = inlined_call_operand.vmem [shape: bf16[512,128], index: 2, kind: output, shape index: {0}]
  %s3 = inlined_call_operand.vmem [shape: f32[8,128], index: 3, kind: output, shape index: {1}]
  %4 = xla_tuple %s2, %s3
  %s5 = sld [smem:[#allocation0]]
  $region34: #{basic_block_forward.4} parent=0
    _
  %s7 = ssub.s32 1, %s5
  %s8 = scalar_select 0, %s7, %s5
  // Predicated region
  $region2: #{basic_block_forward.4} parent=0 // pred_check
    _
  $region3: #{basic_block_forward.4} parent=0 // pred_check_branch
    %10 = sbr.rel (0) target = $region5
  $region4: #{basic_block_forward.4} parent=0 // pred_region
    _
  $region5: #{basic_block_forward.4} parent=0 // pred_fallthru
    _
  // Predicated region
  $region6: #{basic_block_forward.4} parent=0 // pred_check
    _
  $region7: #{basic_block_forward.4} parent=0 // pred_check_branch
    %12 = sbr.rel (0) target = $region9
  $region8: #{basic_block_forward.4} parent=0 // pred_region
    _
  $region9: #{basic_block_forward.4} parent=0 // pred_fallthru
    _
  %p14 = scmp.eq.s32.totalorder 0, 0
  // Predicated region
  $region10: #{basic_block_forward.4} parent=0 // pred_check
    %p15 = pneg %p14
  $region11: #{basic_block_forward.4} parent=0 // pred_check_branch
    %17 = sbr.rel (%p15) target = $region13
  $region12: #{basic_block_forward.4} parent=0 // pred_region
    %18 = vst [vmem:[#allocation2] sm:$0xff] 0.0
    %19 = vst [vmem:[#allocation2 + $0x8] sm:$0xff] 0.0
    %20 = vst [vmem:[#allocation2 + $0x10] sm:$0xff] 0.0
    %21 = vst [vmem:[#allocation2 + $0x18] sm:$0xff] 0.0
    %22 = vst [vmem:[#allocation2 + $0x20] sm:$0xff] 0.0
    %23 = vst [vmem:[#allocation2 + $0x28] sm:$0xff] 0.0
    %24 = vst [vmem:[#allocation2 + $0x30] sm:$0xff] 0.0
    %25 = vst [vmem:[#allocation2 + $0x38] sm:$0xff] 0.0
    %26 = vst [vmem:[#allocation2 + $0x40] sm:$0xff] 0.0
    %27 = vst [vmem:[#allocation2 + $0x48] sm:$0xff] 0.0
    %28 = vst [vmem:[#allocation2 + $0x50] sm:$0xff] 0.0
    %29 = vst [vmem:[#allocation2 + $0x58] sm:$0xff] 0.0
    %30 = vst [vmem:[#allocation2 + $0x60] sm:$0xff] 0.0
    %31 = vst [vmem:[#allocation2 + $0x68] sm:$0xff] 0.0
    %32 = vst [vmem:[#allocation2 + $0x70] sm:$0xff] 0.0
    %33 = vst [vmem:[#allocation2 + $0x78] sm:$0xff] 0.0
    %34 = vst [vmem:[#allocation2 + $0x80] sm:$0xff] 0.0
    %35 = vst [vmem:[#allocation2 + $0x88] sm:$0xff] 0.0
    %36 = vst [vmem:[#allocation2 + $0x90] sm:$0xff] 0.0
    %37 = vst [vmem:[#allocation2 + $0x98] sm:$0xff] 0.0
    %38 = vst [vmem:[#allocation2 + $0xa0] sm:$0xff] 0.0
    %39 = vst [vmem:[#allocation2 + $0xa8] sm:$0xff] 0.0
    %40 = vst [vmem:[#allocation2 + $0xb0] sm:$0xff] 0.0
    %41 = vst [vmem:[#allocation2 + $0xb8] sm:$0xff] 0.0
    %42 = vst [vmem:[#allocation2 + $0xc0] sm:$0xff] 0.0
    %43 = vst [vmem:[#allocation2 + $0xc8] sm:$0xff] 0.0
    %44 = vst [vmem:[#allocation2 + $0xd0] sm:$0xff] 0.0
    %45 = vst [vmem:[#allocation2 + $0xd8] sm:$0xff] 0.0
    %46 = vst [vmem:[#allocation2 + $0xe0] sm:$0xff] 0.0
    %47 = vst [vmem:[#allocation2 + $0xe8] sm:$0xff] 0.0
    %48 = vst [vmem:[#allocation2 + $0xf0] sm:$0xff] 0.0
    %49 = vst [vmem:[#allocation2 + $0xf8] sm:$0xff] 0.0
    %50 = vst [vmem:[#allocation2 + $0x100] sm:$0xff] 0.0
    %51 = vst [vmem:[#allocation2 + $0x108] sm:$0xff] 0.0
    %52 = vst [vmem:[#allocation2 + $0x110] sm:$0xff] 0.0
    %53 = vst [vmem:[#allocation2 + $0x118] sm:$0xff] 0.0
    %54 = vst [vmem:[#allocation2 + $0x120] sm:$0xff] 0.0
    %55 = vst [vmem:[#allocation2 + $0x128] sm:$0xff] 0.0
    %56 = vst [vmem:[#allocation2 + $0x130] sm:$0xff] 0.0
    %57 = vst [vmem:[#allocation2 + $0x138] sm:$0xff] 0.0
    %58 = vst [vmem:[#allocation2 + $0x140] sm:$0xff] 0.0
    %59 = vst [vmem:[#allocation2 + $0x148] sm:$0xff] 0.0
    %60 = vst [vmem:[#allocation2 + $0x150] sm:$0xff] 0.0
    %61 = vst [vmem:[#allocation2 + $0x158] sm:$0xff] 0.0
    %62 = vst [vmem:[#allocation2 + $0x160] sm:$0xff] 0.0
    %63 = vst [vmem:[#allocation2 + $0x168] sm:$0xff] 0.0
    %64 = vst [vmem:[#allocation2 + $0x170] sm:$0xff] 0.0
    %65 = vst [vmem:[#allocation2 + $0x178] sm:$0xff] 0.0
    %66 = vst [vmem:[#allocation2 + $0x180] sm:$0xff] 0.0
    %67 = vst [vmem:[#allocation2 + $0x188] sm:$0xff] 0.0
    %68 = vst [vmem:[#allocation2 + $0x190] sm:$0xff] 0.0
    %69 = vst [vmem:[#allocation2 + $0x198] sm:$0xff] 0.0
    %70 = vst [vmem:[#allocation2 + $0x1a0] sm:$0xff] 0.0
    %71 = vst [vmem:[#allocation2 + $0x1a8] sm:$0xff] 0.0
    %72 = vst [vmem:[#allocation2 + $0x1b0] sm:$0xff] 0.0
    %73 = vst [vmem:[#allocation2 + $0x1b8] sm:$0xff] 0.0
    %74 = vst [vmem:[#allocation2 + $0x1c0] sm:$0xff] 0.0
    %75 = vst [vmem:[#allocation2 + $0x1c8] sm:$0xff] 0.0
    %76 = vst [vmem:[#allocation2 + $0x1d0] sm:$0xff] 0.0
    %77 = vst [vmem:[#allocation2 + $0x1d8] sm:$0xff] 0.0
    %78 = vst [vmem:[#allocation2 + $0x1e0] sm:$0xff] 0.0
    %79 = vst [vmem:[#allocation2 + $0x1e8] sm:$0xff] 0.0
    %80 = vst [vmem:[#allocation2 + $0x1f0] sm:$0xff] 0.0
    %81 = vst [vmem:[#allocation2 + $0x1f8] sm:$0xff] 0.0
  $region13: #{basic_block_forward.4} parent=0 // pred_fallthru
    _
  %v82 = vld [vmem:[#allocation2] sm:$0xff]
  %v83 = vld [vmem:[#allocation2 + $0x8] sm:$0xff]
  %v84 = vld [vmem:[#allocation2 + $0x10] sm:$0xff]
  %v85 = vld [vmem:[#allocation2 + $0x18] sm:$0xff]
  %v86 = vld [vmem:[#allocation2 + $0x20] sm:$0xff]
  %v87 = vld [vmem:[#allocation2 + $0x28] sm:$0xff]
  %v88 = vld [vmem:[#allocation2 + $0x30] sm:$0xff]
  %v89 = vld [vmem:[#allocation2 + $0x38] sm:$0xff]
  %v90 = vld [vmem:[#allocation2 + $0x40] sm:$0xff]
  %v91 = vld [vmem:[#allocation2 + $0x48] sm:$0xff]
  %v92 = vld [vmem:[#allocation2 + $0x50] sm:$0xff]
  %v93 = vld [vmem:[#allocation2 + $0x58] sm:$0xff]
  %v94 = vld [vmem:[#allocation2 + $0x60] sm:$0xff]
  %v95 = vld [vmem:[#allocation2 + $0x68] sm:$0xff]
  %v96 = vld [vmem:[#allocation2 + $0x70] sm:$0xff]
  %v97 = vld [vmem:[#allocation2 + $0x78] sm:$0xff]
  %v98 = vld [vmem:[#allocation2 + $0x80] sm:$0xff]
  %v99 = vld [vmem:[#allocation2 + $0x88] sm:$0xff]
  %v100 = vld [vmem:[#allocation2 + $0x90] sm:$0xff]
  %v101 = vld [vmem:[#allocation2 + $0x98] sm:$0xff]
  %v102 = vld [vmem:[#allocation2 + $0xa0] sm:$0xff]
  %v103 = vld [vmem:[#allocation2 + $0xa8] sm:$0xff]
  %v104 = vld [vmem:[#allocation2 + $0xb0] sm:$0xff]
  %v105 = vld [vmem:[#allocation2 + $0xb8] sm:$0xff]
  %v106 = vld [vmem:[#allocation2 + $0xc0] sm:$0xff]
  %v107 = vld [vmem:[#allocation2 + $0xc8] sm:$0xff]
  %v108 = vld [vmem:[#allocation2 + $0xd0] sm:$0xff]
  %v109 = vld [vmem:[#allocation2 + $0xd8] sm:$0xff]
  %v110 = vld [vmem:[#allocation2 + $0xe0] sm:$0xff]
  %v111 = vld [vmem:[#allocation2 + $0xe8] sm:$0xff]
  %v112 = vld [vmem:[#allocation2 + $0xf0] sm:$0xff]
  %v113 = vld [vmem:[#allocation2 + $0xf8] sm:$0xff]
  %v114 = vld [vmem:[#allocation2 + $0x100] sm:$0xff]
  %v115 = vld [vmem:[#allocation2 + $0x108] sm:$0xff]
  %v116 = vld [vmem:[#allocation2 + $0x110] sm:$0xff]
  %v117 = vld [vmem:[#allocation2 + $0x118] sm:$0xff]
  %v118 = vld [vmem:[#allocation2 + $0x120] sm:$0xff]
  %v119 = vld [vmem:[#allocation2 + $0x128] sm:$0xff]
  %v120 = vld [vmem:[#allocation2 + $0x130] sm:$0xff]
  %v121 = vld [vmem:[#allocation2 + $0x138] sm:$0xff]
  %v122 = vld [vmem:[#allocation2 + $0x140] sm:$0xff]
  %v123 = vld [vmem:[#allocation2 + $0x148] sm:$0xff]
  %v124 = vld [vmem:[#allocation2 + $0x150] sm:$0xff]
  %v125 = vld [vmem:[#allocation2 + $0x158] sm:$0xff]
  %v126 = vld [vmem:[#allocation2 + $0x160] sm:$0xff]
  %v127 = vld [vmem:[#allocation2 + $0x168] sm:$0xff]
  %v128 = vld [vmem:[#allocation2 + $0x170] sm:$0xff]
  %v129 = vld [vmem:[#allocation2 + $0x178] sm:$0xff]
  %v130 = vld [vmem:[#allocation2 + $0x180] sm:$0xff]
  %v131 = vld [vmem:[#allocation2 + $0x188] sm:$0xff]
  %v132 = vld [vmem:[#allocation2 + $0x190] sm:$0xff]
  %v133 = vld [vmem:[#allocation2 + $0x198] sm:$0xff]
  %v134 = vld [vmem:[#allocation2 + $0x1a0] sm:$0xff]
  %v135 = vld [vmem:[#allocation2 + $0x1a8] sm:$0xff]
  %v136 = vld [vmem:[#allocation2 + $0x1b0] sm:$0xff]
  %v137 = vld [vmem:[#allocation2 + $0x1b8] sm:$0xff]
  %v138 = vld [vmem:[#allocation2 + $0x1c0] sm:$0xff]
  %v139 = vld [vmem:[#allocation2 + $0x1c8] sm:$0xff]
  %v140 = vld [vmem:[#allocation2 + $0x1d0] sm:$0xff]
  %v141 = vld [vmem:[#allocation2 + $0x1d8] sm:$0xff]
  %v142 = vld [vmem:[#allocation2 + $0x1e0] sm:$0xff]
  %v143 = vld [vmem:[#allocation2 + $0x1e8] sm:$0xff]
  %v144 = vld [vmem:[#allocation2 + $0x1f0] sm:$0xff]
  %v145 = vld [vmem:[#allocation2 + $0x1f8] sm:$0xff]
  %v146 = vld [vmem:[%s0] sm:$0xf]
  %v147 = vld [vmem:[%s0 + $0x4] sm:$0xf]
  %v148 = vld [vmem:[%s0 + $0x8] sm:$0xf]
  %v149 = vld [vmem:[%s0 + $0xc] sm:$0xf]
  %v150 = vld [vmem:[%s0 + $0x10] sm:$0xf]
  %v151 = vld [vmem:[%s0 + $0x14] sm:$0xf]
  %v152 = vld [vmem:[%s0 + $0x18] sm:$0xf]
  %v153 = vld [vmem:[%s0 + $0x1c] sm:$0xf]
  %v154 = vld [vmem:[%s0 + $0x20] sm:$0xf]
  %v155 = vld [vmem:[%s0 + $0x24] sm:$0xf]
  %v156 = vld [vmem:[%s0 + $0x28] sm:$0xf]
  %v157 = vld [vmem:[%s0 + $0x2c] sm:$0xf]
  %v158 = vld [vmem:[%s0 + $0x30] sm:$0xf]
  %v159 = vld [vmem:[%s0 + $0x34] sm:$0xf]
  %v160 = vld [vmem:[%s0 + $0x38] sm:$0xf]
  %v161 = vld [vmem:[%s0 + $0x3c] sm:$0xf]
  %v162 = vld [vmem:[%s0 + $0x40] sm:$0xf]
  %v163 = vld [vmem:[%s0 + $0x44] sm:$0xf]
  %v164 = vld [vmem:[%s0 + $0x48] sm:$0xf]
  %v165 = vld [vmem:[%s0 + $0x4c] sm:$0xf]
  %v166 = vld [vmem:[%s0 + $0x50] sm:$0xf]
  %v167 = vld [vmem:[%s0 + $0x54] sm:$0xf]
  %v168 = vld [vmem:[%s0 + $0x58] sm:$0xf]
  %v169 = vld [vmem:[%s0 + $0x5c] sm:$0xf]
  %v170 = vld [vmem:[%s0 + $0x60] sm:$0xf]
  %v171 = vld [vmem:[%s0 + $0x64] sm:$0xf]
  %v172 = vld [vmem:[%s0 + $0x68] sm:$0xf]
  %v173 = vld [vmem:[%s0 + $0x6c] sm:$0xf]
  %v174 = vld [vmem:[%s0 + $0x70] sm:$0xf]
  %v175 = vld [vmem:[%s0 + $0x74] sm:$0xf]
  %v176 = vld [vmem:[%s0 + $0x78] sm:$0xf]
  %v177 = vld [vmem:[%s0 + $0x7c] sm:$0xf]
  %v178 = vld [vmem:[%s0 + $0x80] sm:$0xf]
  %v179 = vld [vmem:[%s0 + $0x84] sm:$0xf]
  %v180 = vld [vmem:[%s0 + $0x88] sm:$0xf]
  %v181 = vld [vmem:[%s0 + $0x8c] sm:$0xf]
  %v182 = vld [vmem:[%s0 + $0x90] sm:$0xf]
  %v183 = vld [vmem:[%s0 + $0x94] sm:$0xf]
  %v184 = vld [vmem:[%s0 + $0x98] sm:$0xf]
  %v185 = vld [vmem:[%s0 + $0x9c] sm:$0xf]
  %v186 = vld [vmem:[%s0 + $0xa0] sm:$0xf]
  %v187 = vld [vmem:[%s0 + $0xa4] sm:$0xf]
  %v188 = vld [vmem:[%s0 + $0xa8] sm:$0xf]
  %v189 = vld [vmem:[%s0 + $0xac] sm:$0xf]
  %v190 = vld [vmem:[%s0 + $0xb0] sm:$0xf]
  %v191 = vld [vmem:[%s0 + $0xb4] sm:$0xf]
  %v192 = vld [vmem:[%s0 + $0xb8] sm:$0xf]
  %v193 = vld [vmem:[%s0 + $0xbc] sm:$0xf]
  %v194 = vld [vmem:[%s0 + $0xc0] sm:$0xf]
  %v195 = vld [vmem:[%s0 + $0xc4] sm:$0xf]
  %v196 = vld [vmem:[%s0 + $0xc8] sm:$0xf]
  %v197 = vld [vmem:[%s0 + $0xcc] sm:$0xf]
  %v198 = vld [vmem:[%s0 + $0xd0] sm:$0xf]
  %v199 = vld [vmem:[%s0 + $0xd4] sm:$0xf]
  %v200 = vld [vmem:[%s0 + $0xd8] sm:$0xf]
  %v201 = vld [vmem:[%s0 + $0xdc] sm:$0xf]
  %v202 = vld [vmem:[%s0 + $0xe0] sm:$0xf]
  %v203 = vld [vmem:[%s0 + $0xe4] sm:$0xf]
  %v204 = vld [vmem:[%s0 + $0xe8] sm:$0xf]
  %v205 = vld [vmem:[%s0 + $0xec] sm:$0xf]
  %v206 = vld [vmem:[%s0 + $0xf0] sm:$0xf]
  %v207 = vld [vmem:[%s0 + $0xf4] sm:$0xf]
  %v208 = vld [vmem:[%s0 + $0xf8] sm:$0xf]
  %v209 = vld [vmem:[%s0 + $0xfc] sm:$0xf]
  %v210 = vld [vmem:[%s1] sm:$0xf]
  %v211 = vld [vmem:[%s1 + $0x4] sm:$0xf]
  %v212 = vld [vmem:[%s1 + $0x8] sm:$0xf]
  %v213 = vld [vmem:[%s1 + $0xc] sm:$0xf]
  %v214 = vld [vmem:[%s1 + $0x10] sm:$0xf]
  %v215 = vld [vmem:[%s1 + $0x14] sm:$0xf]
  %v216 = vld [vmem:[%s1 + $0x18] sm:$0xf]
  %v217 = vld [vmem:[%s1 + $0x1c] sm:$0xf]
  %v218 = vld [vmem:[%s1 + $0x20] sm:$0xf]
  %v219 = vld [vmem:[%s1 + $0x24] sm:$0xf]
  %v220 = vld [vmem:[%s1 + $0x28] sm:$0xf]
  %v221 = vld [vmem:[%s1 + $0x2c] sm:$0xf]
  %v222 = vld [vmem:[%s1 + $0x30] sm:$0xf]
  %v223 = vld [vmem:[%s1 + $0x34] sm:$0xf]
  %v224 = vld [vmem:[%s1 + $0x38] sm:$0xf]
  %v225 = vld [vmem:[%s1 + $0x3c] sm:$0xf]
  %v290 = vunpack.c.l.b16 %v146
  %v291 = vunpack.c.l.b16 %v147
  %v292 = vunpack.c.l.b16 %v148
  %v293 = vunpack.c.l.b16 %v149
  %v294 = vunpack.c.l.b16 %v150
  %v295 = vunpack.c.l.b16 %v151
  %v296 = vunpack.c.l.b16 %v152
  %v297 = vunpack.c.l.b16 %v153
  %v298 = vunpack.c.l.b16 %v154
  %v299 = vunpack.c.l.b16 %v155
  %v300 = vunpack.c.l.b16 %v156
  %v301 = vunpack.c.l.b16 %v157
  %v302 = vunpack.c.l.b16 %v158
  %v303 = vunpack.c.l.b16 %v159
  %v304 = vunpack.c.l.b16 %v160
  %v305 = vunpack.c.l.b16 %v161
  %v306 = vunpack.c.l.b16 %v162
  %v307 = vunpack.c.l.b16 %v163
  %v308 = vunpack.c.l.b16 %v164
  %v309 = vunpack.c.l.b16 %v165
  %v310 = vunpack.c.l.b16 %v166
  %v311 = vunpack.c.l.b16 %v167
  %v312 = vunpack.c.l.b16 %v168
  %v313 = vunpack.c.l.b16 %v169
  %v314 = vunpack.c.l.b16 %v170
  %v315 = vunpack.c.l.b16 %v171
  %v316 = vunpack.c.l.b16 %v172
  %v317 = vunpack.c.l.b16 %v173
  %v318 = vunpack.c.l.b16 %v174
  %v319 = vunpack.c.l.b16 %v175
  %v320 = vunpack.c.l.b16 %v176
  %v321 = vunpack.c.l.b16 %v177
  %v322 = vunpack.c.l.b16 %v178
  %v323 = vunpack.c.l.b16 %v179
  %v324 = vunpack.c.l.b16 %v180
  %v325 = vunpack.c.l.b16 %v181
  %v326 = vunpack.c.l.b16 %v182
  %v327 = vunpack.c.l.b16 %v183
  %v328 = vunpack.c.l.b16 %v184
  %v329 = vunpack.c.l.b16 %v185
  %v330 = vunpack.c.l.b16 %v186
  %v331 = vunpack.c.l.b16 %v187
  %v332 = vunpack.c.l.b16 %v188
  %v333 = vunpack.c.l.b16 %v189
  %v334 = vunpack.c.l.b16 %v190
  %v335 = vunpack.c.l.b16 %v191
  %v336 = vunpack.c.l.b16 %v192
  %v337 = vunpack.c.l.b16 %v193
  %v338 = vunpack.c.l.b16 %v194
  %v339 = vunpack.c.l.b16 %v195
  %v340 = vunpack.c.l.b16 %v196
  %v341 = vunpack.c.l.b16 %v197
  %v342 = vunpack.c.l.b16 %v198
  %v343 = vunpack.c.l.b16 %v199
  %v344 = vunpack.c.l.b16 %v200
  %v345 = vunpack.c.l.b16 %v201
  %v346 = vunpack.c.l.b16 %v202
  %v347 = vunpack.c.l.b16 %v203
  %v348 = vunpack.c.l.b16 %v204
  %v349 = vunpack.c.l.b16 %v205
  %v350 = vunpack.c.l.b16 %v206
  %v351 = vunpack.c.l.b16 %v207
  %v352 = vunpack.c.l.b16 %v208
  %v353 = vunpack.c.l.b16 %v209
  %v354 = vpack.c.b16 %v291, %v290
  %v355 = vpack.c.b16 %v293, %v292
  %v356 = vpack.c.b16 %v295, %v294
  %v357 = vpack.c.b16 %v297, %v296
  %v358 = vpack.c.b16 %v299, %v298
  %v359 = vpack.c.b16 %v301, %v300
  %v360 = vpack.c.b16 %v303, %v302
  %v361 = vpack.c.b16 %v305, %v304
  %v362 = vpack.c.b16 %v307, %v306
  %v363 = vpack.c.b16 %v309, %v308
  %v364 = vpack.c.b16 %v311, %v310
  %v365 = vpack.c.b16 %v313, %v312
  %v366 = vpack.c.b16 %v315, %v314
  %v367 = vpack.c.b16 %v317, %v316
  %v368 = vpack.c.b16 %v319, %v318
  %v369 = vpack.c.b16 %v321, %v320
  %v370 = vpack.c.b16 %v323, %v322
  %v371 = vpack.c.b16 %v325, %v324
  %v372 = vpack.c.b16 %v327, %v326
  %v373 = vpack.c.b16 %v329, %v328
  %v374 = vpack.c.b16 %v331, %v330
  %v375 = vpack.c.b16 %v333, %v332
  %v376 = vpack.c.b16 %v335, %v334
  %v377 = vpack.c.b16 %v337, %v336
  %v378 = vpack.c.b16 %v339, %v338
  %v379 = vpack.c.b16 %v341, %v340
  %v380 = vpack.c.b16 %v343, %v342
  %v381 = vpack.c.b16 %v345, %v344
  %v382 = vpack.c.b16 %v347, %v346
  %v383 = vpack.c.b16 %v349, %v348
  %v384 = vpack.c.b16 %v351, %v350
  %v385 = vpack.c.b16 %v353, %v352
  %v434 = vunpack.c.l.b16 %v210
  %v435 = vunpack.c.l.b16 %v211
  %v436 = vunpack.c.l.b16 %v212
  %v437 = vunpack.c.l.b16 %v213
  %v438 = vunpack.c.l.b16 %v214
  %v439 = vunpack.c.l.b16 %v215
  %v440 = vunpack.c.l.b16 %v216
  %v441 = vunpack.c.l.b16 %v217
  %v442 = vunpack.c.l.b16 %v218
  %v443 = vunpack.c.l.b16 %v219
  %v444 = vunpack.c.l.b16 %v220
  %v445 = vunpack.c.l.b16 %v221
  %v446 = vunpack.c.l.b16 %v222
  %v447 = vunpack.c.l.b16 %v223
  %v448 = vunpack.c.l.b16 %v224
  %v449 = vunpack.c.l.b16 %v225
  %v450 = vpack.c.b16 %v435, %v434
  %v451 = vpack.c.b16 %v437, %v436
  %v452 = vpack.c.b16 %v439, %v438
  %v453 = vpack.c.b16 %v441, %v440
  %v454 = vpack.c.b16 %v443, %v442
  %v455 = vpack.c.b16 %v445, %v444
  %v456 = vpack.c.b16 %v447, %v446
  %v457 = vpack.c.b16 %v449, %v448
  %466 = vmatprep.subr.bf16.mxu0 0
  %467 = vmatpush1.bf16.msra.mxu0 %v450
  %468 = vmatprep.subr.bf16.mxu0 0
  %469 = vmatpush1.bf16.msra.mxu0 %v451
  %470 = vmatprep.subr.bf16.mxu0 0
  %471 = vmatpush1.bf16.msra.mxu0 %v452
  %472 = vmatprep.subr.bf16.mxu0 0
  %473 = vmatpush1.bf16.msra.mxu0 %v453
  %474 = vmatprep.subr.bf16.mxu0 0
  %475 = vmatpush1.bf16.msra.mxu0 %v454
  %476 = vmatprep.subr.bf16.mxu0 0
  %477 = vmatpush1.bf16.msra.mxu0 %v455
  %478 = vmatprep.subr.bf16.mxu0 0
  %479 = vmatpush1.bf16.msra.mxu0 %v456
  %480 = vmatprep.subr.bf16.mxu0 0
  %481 = vmatpush1.bf16.msra.mxu0 %v457
  %482 = vmatprep.subr.bf16.mxu0 0
  %483 = vmatpush1.bf16.msra.mxu0 0
  %484 = vmatprep.subr.bf16.mxu0 0
  %485 = vmatpush1.bf16.msra.mxu0 0
  %486 = vmatprep.subr.bf16.mxu0 0
  %487 = vmatpush1.bf16.msra.mxu0 0
  %488 = vmatprep.subr.bf16.mxu0 0
  %489 = vmatpush1.bf16.msra.mxu0 0
  %490 = vmatprep.subr.bf16.mxu0 0
  %491 = vmatpush1.bf16.msra.mxu0 0
  %492 = vmatprep.subr.bf16.mxu0 0
  %493 = vmatpush1.bf16.msra.mxu0 0
  %494 = vmatprep.subr.bf16.mxu0 0
  %495 = vmatpush1.bf16.msra.mxu0 0
  %496 = vmatprep.subr.bf16.mxu0 0
  %497 = vmatpush1.bf16.msra.mxu0 0
  %498 = vmatprep.mubr.bf16.mxu0 0
  %499 = vmatmul.mubr.bf16.gmra.mrb[0].mxu0 %v354
  %v500 = vpop.f32.mrb[0].mxu0
  %v501 = vadd.f32 0.0, %v500
  %v502 = vpop.f32.mrb[0].mxu0
  %v503 = vpop.f32.mrb[0].mxu0
  %v504 = vadd.f32 0.0, %v503
  %v505 = vpop.f32.mrb[0].mxu0
  %506 = vmatprep.mubr.bf16.mxu0 0
  %507 = vmatmul.mubr.bf16.gmra.mrb[0].mxu0 %v355
  %v508 = vpop.f32.mrb[0].mxu0
  %v509 = vadd.f32 0.0, %v508
  %v510 = vpop.f32.mrb[0].mxu0
  %v511 = vpop.f32.mrb[0].mxu0
  %v512 = vadd.f32 0.0, %v511
  %v513 = vpop.f32.mrb[0].mxu0
  %514 = vmatprep.mubr.bf16.mxu0 0
  %515 = vmatmul.mubr.bf16.gmra.mrb[0].mxu0 %v356
  %v516 = vpop.f32.mrb[0].mxu0
  %v517 = vadd.f32 0.0, %v516
  %v518 = vpop.f32.mrb[0].mxu0
  %v519 = vpop.f32.mrb[0].mxu0
  %v520 = vadd.f32 0.0, %v519
  %v521 = vpop.f32.mrb[0].mxu0
  %522 = vmatprep.mubr.bf16.mxu0 0
  %523 = vmatmul.mubr.bf16.gmra.mrb[0].mxu0 %v357
  %v524 = vpop.f32.mrb[0].mxu0
  %v525 = vadd.f32 0.0, %v524
  %v526 = vpop.f32.mrb[0].mxu0
  %v527 = vpop.f32.mrb[0].mxu0
  %v528 = vadd.f32 0.0, %v527
  %v529 = vpop.f32.mrb[0].mxu0
  %530 = vmatprep.mubr.bf16.mxu0 0
  %531 = vmatmul.mubr.bf16.gmra.mrb[0].mxu0 %v358
  %v532 = vpop.f32.mrb[0].mxu0
  %v533 = vadd.f32 0.0, %v532
  %v534 = vpop.f32.mrb[0].mxu0
  %v535 = vpop.f32.mrb[0].mxu0
  %v536 = vadd.f32 0.0, %v535
  %v537 = vpop.f32.mrb[0].mxu0
  %538 = vmatprep.mubr.bf16.mxu0 0
  %539 = vmatmul.mubr.bf16.gmra.mrb[0].mxu0 %v359
  %v540 = vpop.f32.mrb[0].mxu0
  %v541 = vadd.f32 0.0, %v540
  %v542 = vpop.f32.mrb[0].mxu0
  %v543 = vpop.f32.mrb[0].mxu0
  %v544 = vadd.f32 0.0, %v543
  %v545 = vpop.f32.mrb[0].mxu0
  %546 = vmatprep.mubr.bf16.mxu0 0
  %547 = vmatmul.mubr.bf16.gmra.mrb[0].mxu0 %v360
  %v548 = vpop.f32.mrb[0].mxu0
  %v549 = vadd.f32 0.0, %v548
  %v550 = vpop.f32.mrb[0].mxu0
  %v551 = vpop.f32.mrb[0].mxu0
  %v552 = vadd.f32 0.0, %v551
  %v553 = vpop.f32.mrb[0].mxu0
  %554 = vmatprep.mubr.bf16.mxu0 0
  %555 = vmatmul.mubr.bf16.gmra.mrb[0].mxu0 %v361
  %v556 = vpop.f32.mrb[0].mxu0
  %v557 = vadd.f32 0.0, %v556
  %v558 = vpop.f32.mrb[0].mxu0
  %v559 = vpop.f32.mrb[0].mxu0
  %v560 = vadd.f32 0.0, %v559
  %v561 = vpop.f32.mrb[0].mxu0
  %562 = vmatprep.mubr.bf16.mxu0 0
  %563 = vmatmul.mubr.bf16.gmra.mrb[0].mxu0 %v362
  %v564 = vpop.f32.mrb[0].mxu0
  %v565 = vadd.f32 0.0, %v564
  %v566 = vpop.f32.mrb[0].mxu0
  %v567 = vpop.f32.mrb[0].mxu0
  %v568 = vadd.f32 0.0, %v567
  %v569 = vpop.f32.mrb[0].mxu0
  %570 = vmatprep.mubr.bf16.mxu0 0
  %571 = vmatmul.mubr.bf16.gmra.mrb[0].mxu0 %v363
  %v572 = vpop.f32.mrb[0].mxu0
  %v573 = vadd.f32 0.0, %v572
  %v574 = vpop.f32.mrb[0].mxu0
  %v575 = vpop.f32.mrb[0].mxu0
  %v576 = vadd.f32 0.0, %v575
  %v577 = vpop.f32.mrb[0].mxu0
  %578 = vmatprep.mubr.bf16.mxu0 0
  %579 = vmatmul.mubr.bf16.gmra.mrb[0].mxu0 %v364
  %v580 = vpop.f32.mrb[0].mxu0
  %v581 = vadd.f32 0.0, %v580
  %v582 = vpop.f32.mrb[0].mxu0
  %v583 = vpop.f32.mrb[0].mxu0
  %v584 = vadd.f32 0.0, %v583
  %v585 = vpop.f32.mrb[0].mxu0
  %586 = vmatprep.mubr.bf16.mxu0 0
  %587 = vmatmul.mubr.bf16.gmra.mrb[0].mxu0 %v365
  %v588 = vpop.f32.mrb[0].mxu0
  %v589 = vadd.f32 0.0, %v588
  %v590 = vpop.f32.mrb[0].mxu0
  %v591 = vpop.f32.mrb[0].mxu0
  %v592 = vadd.f32 0.0, %v591
  %v593 = vpop.f32.mrb[0].mxu0
  %594 = vmatprep.mubr.bf16.mxu0 0
  %595 = vmatmul.mubr.bf16.gmra.mrb[0].mxu0 %v366
  %v596 = vpop.f32.mrb[0].mxu0
  %v597 = vadd.f32 0.0, %v596
  %v598 = vpop.f32.mrb[0].mxu0
  %v599 = vpop.f32.mrb[0].mxu0
  %v600 = vadd.f32 0.0, %v599
  %v601 = vpop.f32.mrb[0].mxu0
  %602 = vmatprep.mubr.bf16.mxu0 0
  %603 = vmatmul.mubr.bf16.gmra.mrb[0].mxu0 %v367
  %v604 = vpop.f32.mrb[0].mxu0
  %v605 = vadd.f32 0.0, %v604
  %v606 = vpop.f32.mrb[0].mxu0
  %v607 = vpop.f32.mrb[0].mxu0
  %v608 = vadd.f32 0.0, %v607
  %v609 = vpop.f32.mrb[0].mxu0
  %610 = vmatprep.mubr.bf16.mxu0 0
  %611 = vmatmul.mubr.bf16.gmra.mrb[0].mxu0 %v368
  %v612 = vpop.f32.mrb[0].mxu0
  %v613 = vadd.f32 0.0, %v612
  %v614 = vpop.f32.mrb[0].mxu0
  %v615 = vpop.f32.mrb[0].mxu0
  %v616 = vadd.f32 0.0, %v615
  %v617 = vpop.f32.mrb[0].mxu0
  %618 = vmatprep.mubr.bf16.mxu0 0
  %619 = vmatmul.mubr.bf16.gmra.mrb[0].mxu0 %v369
  %v620 = vpop.f32.mrb[0].mxu0
  %v621 = vadd.f32 0.0, %v620
  %v622 = vpop.f32.mrb[0].mxu0
  %v623 = vpop.f32.mrb[0].mxu0
  %v624 = vadd.f32 0.0, %v623
  %v625 = vpop.f32.mrb[0].mxu0
  %626 = vmatprep.mubr.bf16.mxu0 0
  %627 = vmatmul.mubr.bf16.gmra.mrb[0].mxu0 %v370
  %v628 = vpop.f32.mrb[0].mxu0
  %v629 = vadd.f32 0.0, %v628
  %v630 = vpop.f32.mrb[0].mxu0
  %v631 = vpop.f32.mrb[0].mxu0
  %v632 = vadd.f32 0.0, %v631
  %v633 = vpop.f32.mrb[0].mxu0
  %634 = vmatprep.mubr.bf16.mxu0 0
  %635 = vmatmul.mubr.bf16.gmra.mrb[0].mxu0 %v371
  %v636 = vpop.f32.mrb[0].mxu0
  %v637 = vadd.f32 0.0, %v636
  %v638 = vpop.f32.mrb[0].mxu0
  %v639 = vpop.f32.mrb[0].mxu0
  %v640 = vadd.f32 0.0, %v639
  %v641 = vpop.f32.mrb[0].mxu0
  %642 = vmatprep.mubr.bf16.mxu0 0
  %643 = vmatmul.mubr.bf16.gmra.mrb[0].mxu0 %v372
  %v644 = vpop.f32.mrb[0].mxu0
  %v645 = vadd.f32 0.0, %v644
  %v646 = vpop.f32.mrb[0].mxu0
  %v647 = vpop.f32.mrb[0].mxu0
  %v648 = vadd.f32 0.0, %v647
  %v649 = vpop.f32.mrb[0].mxu0
  %650 = vmatprep.mubr.bf16.mxu0 0
  %651 = vmatmul.mubr.bf16.gmra.mrb[0].mxu0 %v373
  %v652 = vpop.f32.mrb[0].mxu0
  %v653 = vadd.f32 0.0, %v652
  %v654 = vpop.f32.mrb[0].mxu0
  %v655 = vpop.f32.mrb[0].mxu0
  %v656 = vadd.f32 0.0, %v655
  %v657 = vpop.f32.mrb[0].mxu0
  %658 = vmatprep.mubr.bf16.mxu0 0
  %659 = vmatmul.mubr.bf16.gmra.mrb[0].mxu0 %v374
  %v660 = vpop.f32.mrb[0].mxu0
  %v661 = vadd.f32 0.0, %v660
  %v662 = vpop.f32.mrb[0].mxu0
  %v663 = vpop.f32.mrb[0].mxu0
  %v664 = vadd.f32 0.0, %v663
  %v665 = vpop.f32.mrb[0].mxu0
  %666 = vmatprep.mubr.bf16.mxu0 0
  %667 = vmatmul.mubr.bf16.gmra.mrb[0].mxu0 %v375
  %v668 = vpop.f32.mrb[0].mxu0
  %v669 = vadd.f32 0.0, %v668
  %v670 = vpop.f32.mrb[0].mxu0
  %v671 = vpop.f32.mrb[0].mxu0
  %v672 = vadd.f32 0.0, %v671
  %v673 = vpop.f32.mrb[0].mxu0
  %674 = vmatprep.mubr.bf16.mxu0 0
  %675 = vmatmul.mubr.bf16.gmra.mrb[0].mxu0 %v376
  %v676 = vpop.f32.mrb[0].mxu0
  %v677 = vadd.f32 0.0, %v676
  %v678 = vpop.f32.mrb[0].mxu0
  %v679 = vpop.f32.mrb[0].mxu0
  %v680 = vadd.f32 0.0, %v679
  %v681 = vpop.f32.mrb[0].mxu0
  %682 = vmatprep.mubr.bf16.mxu0 0
  %683 = vmatmul.mubr.bf16.gmra.mrb[0].mxu0 %v377
  %v684 = vpop.f32.mrb[0].mxu0
  %v685 = vadd.f32 0.0, %v684
  %v686 = vpop.f32.mrb[0].mxu0
  %v687 = vpop.f32.mrb[0].mxu0
  %v688 = vadd.f32 0.0, %v687
  %v689 = vpop.f32.mrb[0].mxu0
  %690 = vmatprep.mubr.bf16.mxu0 0
  %691 = vmatmul.mubr.bf16.gmra.mrb[0].mxu0 %v378
  %v692 = vpop.f32.mrb[0].mxu0
  %v693 = vadd.f32 0.0, %v692
  %v694 = vpop.f32.mrb[0].mxu0
  %v695 = vpop.f32.mrb[0].mxu0
  %v696 = vadd.f32 0.0, %v695
  %v697 = vpop.f32.mrb[0].mxu0
  %698 = vmatprep.mubr.bf16.mxu0 0
  %699 = vmatmul.mubr.bf16.gmra.mrb[0].mxu0 %v379
  %v700 = vpop.f32.mrb[0].mxu0
  %v701 = vadd.f32 0.0, %v700
  %v702 = vpop.f32.mrb[0].mxu0
  %v703 = vpop.f32.mrb[0].mxu0
  %v704 = vadd.f32 0.0, %v703
  %v705 = vpop.f32.mrb[0].mxu0
  %706 = vmatprep.mubr.bf16.mxu0 0
  %707 = vmatmul.mubr.bf16.gmra.mrb[0].mxu0 %v380
  %v708 = vpop.f32.mrb[0].mxu0
  %v709 = vadd.f32 0.0, %v708
  %v710 = vpop.f32.mrb[0].mxu0
  %v711 = vpop.f32.mrb[0].mxu0
  %v712 = vadd.f32 0.0, %v711
  %v713 = vpop.f32.mrb[0].mxu0
  %714 = vmatprep.mubr.bf16.mxu0 0
  %715 = vmatmul.mubr.bf16.gmra.mrb[0].mxu0 %v381
  %v716 = vpop.f32.mrb[0].mxu0
  %v717 = vadd.f32 0.0, %v716
  %v718 = vpop.f32.mrb[0].mxu0
  %v719 = vpop.f32.mrb[0].mxu0
  %v720 = vadd.f32 0.0, %v719
  %v721 = vpop.f32.mrb[0].mxu0
  %722 = vmatprep.mubr.bf16.mxu0 0
  %723 = vmatmul.mubr.bf16.gmra.mrb[0].mxu0 %v382
  %v724 = vpop.f32.mrb[0].mxu0
  %v725 = vadd.f32 0.0, %v724
  %v726 = vpop.f32.mrb[0].mxu0
  %v727 = vpop.f32.mrb[0].mxu0
  %v728 = vadd.f32 0.0, %v727
  %v729 = vpop.f32.mrb[0].mxu0
  %730 = vmatprep.mubr.bf16.mxu0 0
  %731 = vmatmul.mubr.bf16.gmra.mrb[0].mxu0 %v383
  %v732 = vpop.f32.mrb[0].mxu0
  %v733 = vadd.f32 0.0, %v732
  %v734 = vpop.f32.mrb[0].mxu0
  %v735 = vpop.f32.mrb[0].mxu0
  %v736 = vadd.f32 0.0, %v735
  %v737 = vpop.f32.mrb[0].mxu0
  %738 = vmatprep.mubr.bf16.mxu0 0
  %739 = vmatmul.mubr.bf16.gmra.mrb[0].mxu0 %v384
  %v740 = vpop.f32.mrb[0].mxu0
  %v741 = vadd.f32 0.0, %v740
  %v742 = vpop.f32.mrb[0].mxu0
  %v743 = vpop.f32.mrb[0].mxu0
  %v744 = vadd.f32 0.0, %v743
  %v745 = vpop.f32.mrb[0].mxu0
  %746 = vmatprep.mubr.bf16.mxu0 0
  %747 = vmatmul.mubr.bf16.gmra.mrb[0].mxu0 %v385
  %v748 = vpop.f32.mrb[0].mxu0
  %v749 = vadd.f32 0.0, %v748
  %v750 = vpop.f32.mrb[0].mxu0
  %v751 = vpop.f32.mrb[0].mxu0
  %v752 = vadd.f32 0.0, %v751
  %v753 = vpop.f32.mrb[0].mxu0
  %754 = vdwg.mxu0
  %v755 = vadd.f32 %v82, %v501
  %v756 = vadd.f32 %v83, %v504
  %v757 = vadd.f32 %v84, %v509
  %v758 = vadd.f32 %v85, %v512
  %v759 = vadd.f32 %v86, %v517
  %v760 = vadd.f32 %v87, %v520
  %v761 = vadd.f32 %v88, %v525
  %v762 = vadd.f32 %v89, %v528
  %v763 = vadd.f32 %v90, %v533
  %v764 = vadd.f32 %v91, %v536
  %v765 = vadd.f32 %v92, %v541
  %v766 = vadd.f32 %v93, %v544
  %v767 = vadd.f32 %v94, %v549
  %v768 = vadd.f32 %v95, %v552
  %v769 = vadd.f32 %v96, %v557
  %v770 = vadd.f32 %v97, %v560
  %v771 = vadd.f32 %v98, %v565
  %v772 = vadd.f32 %v99, %v568
  %v773 = vadd.f32 %v100, %v573
  %v774 = vadd.f32 %v101, %v576
  %v775 = vadd.f32 %v102, %v581
  %v776 = vadd.f32 %v103, %v584
  %v777 = vadd.f32 %v104, %v589
  %v778 = vadd.f32 %v105, %v592
  %v779 = vadd.f32 %v106, %v597
  %v780 = vadd.f32 %v107, %v600
  %v781 = vadd.f32 %v108, %v605
  %v782 = vadd.f32 %v109, %v608
  %v783 = vadd.f32 %v110, %v613
  %v784 = vadd.f32 %v111, %v616
  %v785 = vadd.f32 %v112, %v621
  %v786 = vadd.f32 %v113, %v624
  %v787 = vadd.f32 %v114, %v629
  %v788 = vadd.f32 %v115, %v632
  %v789 = vadd.f32 %v116, %v637
  %v790 = vadd.f32 %v117, %v640
  %v791 = vadd.f32 %v118, %v645
  %v792 = vadd.f32 %v119, %v648
  %v793 = vadd.f32 %v120, %v653
  %v794 = vadd.f32 %v121, %v656
  %v795 = vadd.f32 %v122, %v661
  %v796 = vadd.f32 %v123, %v664
  %v797 = vadd.f32 %v124, %v669
  %v798 = vadd.f32 %v125, %v672
  %v799 = vadd.f32 %v126, %v677
  %v800 = vadd.f32 %v127, %v680
  %v801 = vadd.f32 %v128, %v685
  %v802 = vadd.f32 %v129, %v688
  %v803 = vadd.f32 %v130, %v693
  %v804 = vadd.f32 %v131, %v696
  %v805 = vadd.f32 %v132, %v701
  %v806 = vadd.f32 %v133, %v704
  %v807 = vadd.f32 %v134, %v709
  %v808 = vadd.f32 %v135, %v712
  %v809 = vadd.f32 %v136, %v717
  %v810 = vadd.f32 %v137, %v720
  %v811 = vadd.f32 %v138, %v725
  %v812 = vadd.f32 %v139, %v728
  %v813 = vadd.f32 %v140, %v733
  %v814 = vadd.f32 %v141, %v736
  %v815 = vadd.f32 %v142, %v741
  %v816 = vadd.f32 %v143, %v744
  %v817 = vadd.f32 %v144, %v749
  %v818 = vadd.f32 %v145, %v752
  %819 = vst [vmem:[#allocation2] sm:$0xff] %v755
  %820 = vst [vmem:[#allocation2 + $0x8] sm:$0xff] %v756
  %821 = vst [vmem:[#allocation2 + $0x10] sm:$0xff] %v757
  %822 = vst [vmem:[#allocation2 + $0x18] sm:$0xff] %v758
  %823 = vst [vmem:[#allocation2 + $0x20] sm:$0xff] %v759
  %824 = vst [vmem:[#allocation2 + $0x28] sm:$0xff] %v760
  %825 = vst [vmem:[#allocation2 + $0x30] sm:$0xff] %v761
  %826 = vst [vmem:[#allocation2 + $0x38] sm:$0xff] %v762
  %827 = vst [vmem:[#allocation2 + $0x40] sm:$0xff] %v763
  %828 = vst [vmem:[#allocation2 + $0x48] sm:$0xff] %v764
  %829 = vst [vmem:[#allocation2 + $0x50] sm:$0xff] %v765
  %830 = vst [vmem:[#allocation2 + $0x58] sm:$0xff] %v766
  %831 = vst [vmem:[#allocation2 + $0x60] sm:$0xff] %v767
  %832 = vst [vmem:[#allocation2 + $0x68] sm:$0xff] %v768
  %833 = vst [vmem:[#allocation2 + $0x70] sm:$0xff] %v769
  %834 = vst [vmem:[#allocation2 + $0x78] sm:$0xff] %v770
  %835 = vst [vmem:[#allocation2 + $0x80] sm:$0xff] %v771
  %836 = vst [vmem:[#allocation2 + $0x88] sm:$0xff] %v772
  %837 = vst [vmem:[#allocation2 + $0x90] sm:$0xff] %v773
  %838 = vst [vmem:[#allocation2 + $0x98] sm:$0xff] %v774
  %839 = vst [vmem:[#allocation2 + $0xa0] sm:$0xff] %v775
  %840 = vst [vmem:[#allocation2 + $0xa8] sm:$0xff] %v776
  %841 = vst [vmem:[#allocation2 + $0xb0] sm:$0xff] %v777
  %842 = vst [vmem:[#allocation2 + $0xb8] sm:$0xff] %v778
  %843 = vst [vmem:[#allocation2 + $0xc0] sm:$0xff] %v779
  %844 = vst [vmem:[#allocation2 + $0xc8] sm:$0xff] %v780
  %845 = vst [vmem:[#allocation2 + $0xd0] sm:$0xff] %v781
  %846 = vst [vmem:[#allocation2 + $0xd8] sm:$0xff] %v782
  %847 = vst [vmem:[#allocation2 + $0xe0] sm:$0xff] %v783
  %848 = vst [vmem:[#allocation2 + $0xe8] sm:$0xff] %v784
  %849 = vst [vmem:[#allocation2 + $0xf0] sm:$0xff] %v785
  %850 = vst [vmem:[#allocation2 + $0xf8] sm:$0xff] %v786
  %851 = vst [vmem:[#allocation2 + $0x100] sm:$0xff] %v787
  %852 = vst [vmem:[#allocation2 + $0x108] sm:$0xff] %v788
  %853 = vst [vmem:[#allocation2 + $0x110] sm:$0xff] %v789
  %854 = vst [vmem:[#allocation2 + $0x118] sm:$0xff] %v790
  %855 = vst [vmem:[#allocation2 + $0x120] sm:$0xff] %v791
  %856 = vst [vmem:[#allocation2 + $0x128] sm:$0xff] %v792
  %857 = vst [vmem:[#allocation2 + $0x130] sm:$0xff] %v793
  %858 = vst [vmem:[#allocation2 + $0x138] sm:$0xff] %v794
  %859 = vst [vmem:[#allocation2 + $0x140] sm:$0xff] %v795
  %860 = vst [vmem:[#allocation2 + $0x148] sm:$0xff] %v796
  %861 = vst [vmem:[#allocation2 + $0x150] sm:$0xff] %v797
  %862 = vst [vmem:[#allocation2 + $0x158] sm:$0xff] %v798
  %863 = vst [vmem:[#allocation2 + $0x160] sm:$0xff] %v799
  %864 = vst [vmem:[#allocation2 + $0x168] sm:$0xff] %v800
  %865 = vst [vmem:[#allocation2 + $0x170] sm:$0xff] %v801
  %866 = vst [vmem:[#allocation2 + $0x178] sm:$0xff] %v802
  %867 = vst [vmem:[#allocation2 + $0x180] sm:$0xff] %v803
  %868 = vst [vmem:[#allocation2 + $0x188] sm:$0xff] %v804
  %869 = vst [vmem:[#allocation2 + $0x190] sm:$0xff] %v805
  %870 = vst [vmem:[#allocation2 + $0x198] sm:$0xff] %v806
  %871 = vst [vmem:[#allocation2 + $0x1a0] sm:$0xff] %v807
  %872 = vst [vmem:[#allocation2 + $0x1a8] sm:$0xff] %v808
  %873 = vst [vmem:[#allocation2 + $0x1b0] sm:$0xff] %v809
  %874 = vst [vmem:[#allocation2 + $0x1b8] sm:$0xff] %v810
  %875 = vst [vmem:[#allocation2 + $0x1c0] sm:$0xff] %v811
  %876 = vst [vmem:[#allocation2 + $0x1c8] sm:$0xff] %v812
  %877 = vst [vmem:[#allocation2 + $0x1d0] sm:$0xff] %v813
  %878 = vst [vmem:[#allocation2 + $0x1d8] sm:$0xff] %v814
  %879 = vst [vmem:[#allocation2 + $0x1e0] sm:$0xff] %v815
  %880 = vst [vmem:[#allocation2 + $0x1e8] sm:$0xff] %v816
  %881 = vst [vmem:[#allocation2 + $0x1f0] sm:$0xff] %v817
  %882 = vst [vmem:[#allocation2 + $0x1f8] sm:$0xff] %v818
  // Predicated region
  $region14: #{basic_block_forward.4} parent=0 // pred_check
    %p883 = pneg %p14
  $region15: #{basic_block_forward.4} parent=0 // pred_check_branch
    %885 = sbr.rel (%p883) target = $region17
  $region16: #{basic_block_forward.4} parent=0 // pred_region
    %v886 = vld [vmem:[#allocation2] sm:$0xff]
    %v887 = vld [vmem:[#allocation2 + $0x8] sm:$0xff]
    %v888 = vld [vmem:[#allocation2 + $0x10] sm:$0xff]
    %v889 = vld [vmem:[#allocation2 + $0x18] sm:$0xff]
    %v890 = vld [vmem:[#allocation2 + $0x20] sm:$0xff]
    %v891 = vld [vmem:[#allocation2 + $0x28] sm:$0xff]
    %v892 = vld [vmem:[#allocation2 + $0x30] sm:$0xff]
    %v893 = vld [vmem:[#allocation2 + $0x38] sm:$0xff]
    %v894 = vld [vmem:[#allocation2 + $0x40] sm:$0xff]
    %v895 = vld [vmem:[#allocation2 + $0x48] sm:$0xff]
    %v896 = vld [vmem:[#allocation2 + $0x50] sm:$0xff]
    %v897 = vld [vmem:[#allocation2 + $0x58] sm:$0xff]
    %v898 = vld [vmem:[#allocation2 + $0x60] sm:$0xff]
    %v899 = vld [vmem:[#allocation2 + $0x68] sm:$0xff]
    %v900 = vld [vmem:[#allocation2 + $0x70] sm:$0xff]
    %v901 = vld [vmem:[#allocation2 + $0x78] sm:$0xff]
    %v902 = vld [vmem:[#allocation2 + $0x80] sm:$0xff]
    %v903 = vld [vmem:[#allocation2 + $0x88] sm:$0xff]
    %v904 = vld [vmem:[#allocation2 + $0x90] sm:$0xff]
    %v905 = vld [vmem:[#allocation2 + $0x98] sm:$0xff]
    %v906 = vld [vmem:[#allocation2 + $0xa0] sm:$0xff]
    %v907 = vld [vmem:[#allocation2 + $0xa8] sm:$0xff]
    %v908 = vld [vmem:[#allocation2 + $0xb0] sm:$0xff]
    %v909 = vld [vmem:[#allocation2 + $0xb8] sm:$0xff]
    %v910 = vld [vmem:[#allocation2 + $0xc0] sm:$0xff]
    %v911 = vld [vmem:[#allocation2 + $0xc8] sm:$0xff]
    %v912 = vld [vmem:[#allocation2 + $0xd0] sm:$0xff]
    %v913 = vld [vmem:[#allocation2 + $0xd8] sm:$0xff]
    %v914 = vld [vmem:[#allocation2 + $0xe0] sm:$0xff]
    %v915 = vld [vmem:[#allocation2 + $0xe8] sm:$0xff]
    %v916 = vld [vmem:[#allocation2 + $0xf0] sm:$0xff]
    %v917 = vld [vmem:[#allocation2 + $0xf8] sm:$0xff]
    %v918 = vld [vmem:[#allocation2 + $0x100] sm:$0xff]
    %v919 = vld [vmem:[#allocation2 + $0x108] sm:$0xff]
    %v920 = vld [vmem:[#allocation2 + $0x110] sm:$0xff]
    %v921 = vld [vmem:[#allocation2 + $0x118] sm:$0xff]
    %v922 = vld [vmem:[#allocation2 + $0x120] sm:$0xff]
    %v923 = vld [vmem:[#allocation2 + $0x128] sm:$0xff]
    %v924 = vld [vmem:[#allocation2 + $0x130] sm:$0xff]
    %v925 = vld [vmem:[#allocation2 + $0x138] sm:$0xff]
    %v926 = vld [vmem:[#allocation2 + $0x140] sm:$0xff]
    %v927 = vld [vmem:[#allocation2 + $0x148] sm:$0xff]
    %v928 = vld [vmem:[#allocation2 + $0x150] sm:$0xff]
    %v929 = vld [vmem:[#allocation2 + $0x158] sm:$0xff]
    %v930 = vld [vmem:[#allocation2 + $0x160] sm:$0xff]
    %v931 = vld [vmem:[#allocation2 + $0x168] sm:$0xff]
    %v932 = vld [vmem:[#allocation2 + $0x170] sm:$0xff]
    %v933 = vld [vmem:[#allocation2 + $0x178] sm:$0xff]
    %v934 = vld [vmem:[#allocation2 + $0x180] sm:$0xff]
    %v935 = vld [vmem:[#allocation2 + $0x188] sm:$0xff]
    %v936 = vld [vmem:[#allocation2 + $0x190] sm:$0xff]
    %v937 = vld [vmem:[#allocation2 + $0x198] sm:$0xff]
    %v938 = vld [vmem:[#allocation2 + $0x1a0] sm:$0xff]
    %v939 = vld [vmem:[#allocation2 + $0x1a8] sm:$0xff]
    %v940 = vld [vmem:[#allocation2 + $0x1b0] sm:$0xff]
    %v941 = vld [vmem:[#allocation2 + $0x1b8] sm:$0xff]
    %v942 = vld [vmem:[#allocation2 + $0x1c0] sm:$0xff]
    %v943 = vld [vmem:[#allocation2 + $0x1c8] sm:$0xff]
    %v944 = vld [vmem:[#allocation2 + $0x1d0] sm:$0xff]
    %v945 = vld [vmem:[#allocation2 + $0x1d8] sm:$0xff]
    %v946 = vld [vmem:[#allocation2 + $0x1e0] sm:$0xff]
    %v947 = vld [vmem:[#allocation2 + $0x1e8] sm:$0xff]
    %v948 = vld [vmem:[#allocation2 + $0x1f0] sm:$0xff]
    %v949 = vld [vmem:[#allocation2 + $0x1f8] sm:$0xff]
    %v950 = vpack.c.bf16 %v887, %v886
    %v951 = vpack.c.bf16 %v889, %v888
    %v952 = vpack.c.bf16 %v891, %v890
    %v953 = vpack.c.bf16 %v893, %v892
    %v954 = vpack.c.bf16 %v895, %v894
    %v955 = vpack.c.bf16 %v897, %v896
    %v956 = vpack.c.bf16 %v899, %v898
    %v957 = vpack.c.bf16 %v901, %v900
    %v958 = vpack.c.bf16 %v903, %v902
    %v959 = vpack.c.bf16 %v905, %v904
    %v960 = vpack.c.bf16 %v907, %v906
    %v961 = vpack.c.bf16 %v909, %v908
    %v962 = vpack.c.bf16 %v911, %v910
    %v963 = vpack.c.bf16 %v913, %v912
    %v964 = vpack.c.bf16 %v915, %v914
    %v965 = vpack.c.bf16 %v917, %v916
    %v966 = vpack.c.bf16 %v919, %v918
    %v967 = vpack.c.bf16 %v921, %v920
    %v968 = vpack.c.bf16 %v923, %v922
    %v969 = vpack.c.bf16 %v925, %v924
    %v970 = vpack.c.bf16 %v927, %v926
    %v971 = vpack.c.bf16 %v929, %v928
    %v972 = vpack.c.bf16 %v931, %v930
    %v973 = vpack.c.bf16 %v933, %v932
    %v974 = vpack.c.bf16 %v935, %v934
    %v975 = vpack.c.bf16 %v937, %v936
    %v976 = vpack.c.bf16 %v939, %v938
    %v977 = vpack.c.bf16 %v941, %v940
    %v978 = vpack.c.bf16 %v943, %v942
    %v979 = vpack.c.bf16 %v945, %v944
    %v980 = vpack.c.bf16 %v947, %v946
    %v981 = vpack.c.bf16 %v949, %v948
    %v1014 = vunpack.c.l.b16 %v950
    %v1015 = vunpack.c.h.b16 %v950
    %v1016 = vunpack.c.l.b16 %v951
    %v1017 = vunpack.c.h.b16 %v951
    %v1018 = vunpack.c.l.b16 %v952
    %v1019 = vunpack.c.h.b16 %v952
    %v1020 = vunpack.c.l.b16 %v953
    %v1021 = vunpack.c.h.b16 %v953
    %v1022 = vunpack.c.l.b16 %v954
    %v1023 = vunpack.c.h.b16 %v954
    %v1024 = vunpack.c.l.b16 %v955
    %v1025 = vunpack.c.h.b16 %v955
    %v1026 = vunpack.c.l.b16 %v956
    %v1027 = vunpack.c.h.b16 %v956
    %v1028 = vunpack.c.l.b16 %v957
    %v1029 = vunpack.c.h.b16 %v957
    %v1030 = vunpack.c.l.b16 %v958
    %v1031 = vunpack.c.h.b16 %v958
    %v1032 = vunpack.c.l.b16 %v959
    %v1033 = vunpack.c.h.b16 %v959
    %v1034 = vunpack.c.l.b16 %v960
    %v1035 = vunpack.c.h.b16 %v960
    %v1036 = vunpack.c.l.b16 %v961
    %v1037 = vunpack.c.h.b16 %v961
    %v1038 = vunpack.c.l.b16 %v962
    %v1039 = vunpack.c.h.b16 %v962
    %v1040 = vunpack.c.l.b16 %v963
    %v1041 = vunpack.c.h.b16 %v963
    %v1042 = vunpack.c.l.b16 %v964
    %v1043 = vunpack.c.h.b16 %v964
    %v1044 = vunpack.c.l.b16 %v965
    %v1045 = vunpack.c.h.b16 %v965
    %v1046 = vunpack.c.l.b16 %v966
    %v1047 = vunpack.c.h.b16 %v966
    %v1048 = vunpack.c.l.b16 %v967
    %v1049 = vunpack.c.h.b16 %v967
    %v1050 = vunpack.c.l.b16 %v968
    %v1051 = vunpack.c.h.b16 %v968
    %v1052 = vunpack.c.l.b16 %v969
    %v1053 = vunpack.c.h.b16 %v969
    %v1054 = vunpack.c.l.b16 %v970
    %v1055 = vunpack.c.h.b16 %v970
    %v1056 = vunpack.c.l.b16 %v971
    %v1057 = vunpack.c.h.b16 %v971
    %v1058 = vunpack.c.l.b16 %v972
    %v1059 = vunpack.c.h.b16 %v972
    %v1060 = vunpack.c.l.b16 %v973
    %v1061 = vunpack.c.h.b16 %v973
    %v1062 = vunpack.c.l.b16 %v974
    %v1063 = vunpack.c.h.b16 %v974
    %v1064 = vunpack.c.l.b16 %v975
    %v1065 = vunpack.c.h.b16 %v975
    %v1066 = vunpack.c.l.b16 %v976
    %v1067 = vunpack.c.h.b16 %v976
    %v1068 = vunpack.c.l.b16 %v977
    %v1069 = vunpack.c.h.b16 %v977
    %v1070 = vunpack.c.l.b16 %v978
    %v1071 = vunpack.c.h.b16 %v978
    %v1072 = vunpack.c.l.b16 %v979
    %v1073 = vunpack.c.h.b16 %v979
    %v1074 = vunpack.c.l.b16 %v980
    %v1075 = vunpack.c.h.b16 %v980
    %v1076 = vunpack.c.l.b16 %v981
    %v1077 = vunpack.c.h.b16 %v981
    %v1078 = vpack.c.b16 %v1014, %v1014
    %v1079 = vpack.c.b16 %v1015, %v1015
    %v1080 = vpack.c.b16 %v1016, %v1016
    %v1081 = vpack.c.b16 %v1017, %v1017
    %v1082 = vpack.c.b16 %v1018, %v1018
    %v1083 = vpack.c.b16 %v1019, %v1019
    %v1084 = vpack.c.b16 %v1020, %v1020
    %v1085 = vpack.c.b16 %v1021, %v1021
    %v1086 = vpack.c.b16 %v1022, %v1022
    %v1087 = vpack.c.b16 %v1023, %v1023
    %v1088 = vpack.c.b16 %v1024, %v1024
    %v1089 = vpack.c.b16 %v1025, %v1025
    %v1090 = vpack.c.b16 %v1026, %v1026
    %v1091 = vpack.c.b16 %v1027, %v1027
    %v1092 = vpack.c.b16 %v1028, %v1028
    %v1093 = vpack.c.b16 %v1029, %v1029
    %v1094 = vpack.c.b16 %v1030, %v1030
    %v1095 = vpack.c.b16 %v1031, %v1031
    %v1096 = vpack.c.b16 %v1032, %v1032
    %v1097 = vpack.c.b16 %v1033, %v1033
    %v1098 = vpack.c.b16 %v1034, %v1034
    %v1099 = vpack.c.b16 %v1035, %v1035
    %v1100 = vpack.c.b16 %v1036, %v1036
    %v1101 = vpack.c.b16 %v1037, %v1037
    %v1102 = vpack.c.b16 %v1038, %v1038
    %v1103 = vpack.c.b16 %v1039, %v1039
    %v1104 = vpack.c.b16 %v1040, %v1040
    %v1105 = vpack.c.b16 %v1041, %v1041
    %v1106 = vpack.c.b16 %v1042, %v1042
    %v1107 = vpack.c.b16 %v1043, %v1043
    %v1108 = vpack.c.b16 %v1044, %v1044
    %v1109 = vpack.c.b16 %v1045, %v1045
    %v1110 = vpack.c.b16 %v1046, %v1046
    %v1111 = vpack.c.b16 %v1047, %v1047
    %v1112 = vpack.c.b16 %v1048, %v1048
    %v1113 = vpack.c.b16 %v1049, %v1049
    %v1114 = vpack.c.b16 %v1050, %v1050
    %v1115 = vpack.c.b16 %v1051, %v1051
    %v1116 = vpack.c.b16 %v1052, %v1052
    %v1117 = vpack.c.b16 %v1053, %v1053
    %v1118 = vpack.c.b16 %v1054, %v1054
    %v1119 = vpack.c.b16 %v1055, %v1055
    %v1120 = vpack.c.b16 %v1056, %v1056
    %v1121 = vpack.c.b16 %v1057, %v1057
    %v1122 = vpack.c.b16 %v1058, %v1058
    %v1123 = vpack.c.b16 %v1059, %v1059
    %v1124 = vpack.c.b16 %v1060, %v1060
    %v1125 = vpack.c.b16 %v1061, %v1061
    %v1126 = vpack.c.b16 %v1062, %v1062
    %v1127 = vpack.c.b16 %v1063, %v1063
    %v1128 = vpack.c.b16 %v1064, %v1064
    %v1129 = vpack.c.b16 %v1065, %v1065
    %v1130 = vpack.c.b16 %v1066, %v1066
    %v1131 = vpack.c.b16 %v1067, %v1067
    %v1132 = vpack.c.b16 %v1068, %v1068
    %v1133 = vpack.c.b16 %v1069, %v1069
    %v1134 = vpack.c.b16 %v1070, %v1070
    %v1135 = vpack.c.b16 %v1071, %v1071
    %v1136 = vpack.c.b16 %v1072, %v1072
    %v1137 = vpack.c.b16 %v1073, %v1073
    %v1138 = vpack.c.b16 %v1074, %v1074
    %v1139 = vpack.c.b16 %v1075, %v1075
    %v1140 = vpack.c.b16 %v1076, %v1076
    %v1141 = vpack.c.b16 %v1077, %v1077
    %1206 = vst [vmem:[%s2] sm:$0xf] %v1078
    %1207 = vst [vmem:[%s2 + $0x4] sm:$0xf] %v1079
    %1208 = vst [vmem:[%s2 + $0x8] sm:$0xf] %v1080
    %1209 = vst [vmem:[%s2 + $0xc] sm:$0xf] %v1081
    %1210 = vst [vmem:[%s2 + $0x10] sm:$0xf] %v1082
    %1211 = vst [vmem:[%s2 + $0x14] sm:$0xf] %v1083
    %1212 = vst [vmem:[%s2 + $0x18] sm:$0xf] %v1084
    %1213 = vst [vmem:[%s2 + $0x1c] sm:$0xf] %v1085
    %1214 = vst [vmem:[%s2 + $0x20] sm:$0xf] %v1086
    %1215 = vst [vmem:[%s2 + $0x24] sm:$0xf] %v1087
    %1216 = vst [vmem:[%s2 + $0x28] sm:$0xf] %v1088
    %1217 = vst [vmem:[%s2 + $0x2c] sm:$0xf] %v1089
    %1218 = vst [vmem:[%s2 + $0x30] sm:$0xf] %v1090
    %1219 = vst [vmem:[%s2 + $0x34] sm:$0xf] %v1091
    %1220 = vst [vmem:[%s2 + $0x38] sm:$0xf] %v1092
    %1221 = vst [vmem:[%s2 + $0x3c] sm:$0xf] %v1093
    %1222 = vst [vmem:[%s2 + $0x40] sm:$0xf] %v1094
    %1223 = vst [vmem:[%s2 + $0x44] sm:$0xf] %v1095
    %1224 = vst [vmem:[%s2 + $0x48] sm:$0xf] %v1096
    %1225 = vst [vmem:[%s2 + $0x4c] sm:$0xf] %v1097
    %1226 = vst [vmem:[%s2 + $0x50] sm:$0xf] %v1098
    %1227 = vst [vmem:[%s2 + $0x54] sm:$0xf] %v1099
    %1228 = vst [vmem:[%s2 + $0x58] sm:$0xf] %v1100
    %1229 = vst [vmem:[%s2 + $0x5c] sm:$0xf] %v1101
    %1230 = vst [vmem:[%s2 + $0x60] sm:$0xf] %v1102
    %1231 = vst [vmem:[%s2 + $0x64] sm:$0xf] %v1103
    %1232 = vst [vmem:[%s2 + $0x68] sm:$0xf] %v1104
    %1233 = vst [vmem:[%s2 + $0x6c] sm:$0xf] %v1105
    %1234 = vst [vmem:[%s2 + $0x70] sm:$0xf] %v1106
    %1235 = vst [vmem:[%s2 + $0x74] sm:$0xf] %v1107
    %1236 = vst [vmem:[%s2 + $0x78] sm:$0xf] %v1108
    %1237 = vst [vmem:[%s2 + $0x7c] sm:$0xf] %v1109
    %1238 = vst [vmem:[%s2 + $0x80] sm:$0xf] %v1110
    %1239 = vst [vmem:[%s2 + $0x84] sm:$0xf] %v1111
    %1240 = vst [vmem:[%s2 + $0x88] sm:$0xf] %v1112
    %1241 = vst [vmem:[%s2 + $0x8c] sm:$0xf] %v1113
    %1242 = vst [vmem:[%s2 + $0x90] sm:$0xf] %v1114
    %1243 = vst [vmem:[%s2 + $0x94] sm:$0xf] %v1115
    %1244 = vst [vmem:[%s2 + $0x98] sm:$0xf] %v1116
    %1245 = vst [vmem:[%s2 + $0x9c] sm:$0xf] %v1117
    %1246 = vst [vmem:[%s2 + $0xa0] sm:$0xf] %v1118
    %1247 = vst [vmem:[%s2 + $0xa4] sm:$0xf] %v1119
    %1248 = vst [vmem:[%s2 + $0xa8] sm:$0xf] %v1120
    %1249 = vst [vmem:[%s2 + $0xac] sm:$0xf] %v1121
    %1250 = vst [vmem:[%s2 + $0xb0] sm:$0xf] %v1122
    %1251 = vst [vmem:[%s2 + $0xb4] sm:$0xf] %v1123
    %1252 = vst [vmem:[%s2 + $0xb8] sm:$0xf] %v1124
    %1253 = vst [vmem:[%s2 + $0xbc] sm:$0xf] %v1125
    %1254 = vst [vmem:[%s2 + $0xc0] sm:$0xf] %v1126
    %1255 = vst [vmem:[%s2 + $0xc4] sm:$0xf] %v1127
    %1256 = vst [vmem:[%s2 + $0xc8] sm:$0xf] %v1128
    %1257 = vst [vmem:[%s2 + $0xcc] sm:$0xf] %v1129
    %1258 = vst [vmem:[%s2 + $0xd0] sm:$0xf] %v1130
    %1259 = vst [vmem:[%s2 + $0xd4] sm:$0xf] %v1131
    %1260 = vst [vmem:[%s2 + $0xd8] sm:$0xf] %v1132
    %1261 = vst [vmem:[%s2 + $0xdc] sm:$0xf] %v1133
    %1262 = vst [vmem:[%s2 + $0xe0] sm:$0xf] %v1134
    %1263 = vst [vmem:[%s2 + $0xe4] sm:$0xf] %v1135
    %1264 = vst [vmem:[%s2 + $0xe8] sm:$0xf] %v1136
    %1265 = vst [vmem:[%s2 + $0xec] sm:$0xf] %v1137
    %1266 = vst [vmem:[%s2 + $0xf0] sm:$0xf] %v1138
    %1267 = vst [vmem:[%s2 + $0xf4] sm:$0xf] %v1139
    %1268 = vst [vmem:[%s2 + $0xf8] sm:$0xf] %v1140
    %1269 = vst [vmem:[%s2 + $0xfc] sm:$0xf] %v1141
    %v1270 = vadd.f32 %v886, %v887
    %v1271 = vadd.f32 %v1270, %v888
    %v1272 = vadd.f32 %v1271, %v889
    %v1273 = vadd.f32 %v1272, %v890
    %v1274 = vadd.f32 %v1273, %v891
    %v1275 = vadd.f32 %v1274, %v892
    %v1276 = vadd.f32 %v1275, %v893
    %v1277 = vadd.f32 %v1276, %v894
    %v1278 = vadd.f32 %v1277, %v895
    %v1279 = vadd.f32 %v1278, %v896
    %v1280 = vadd.f32 %v1279, %v897
    %v1281 = vadd.f32 %v1280, %v898
    %v1282 = vadd.f32 %v1281, %v899
    %v1283 = vadd.f32 %v1282, %v900
    %v1284 = vadd.f32 %v1283, %v901
    %v1285 = vadd.f32 %v1284, %v902
    %v1286 = vadd.f32 %v1285, %v903
    %v1287 = vadd.f32 %v1286, %v904
    %v1288 = vadd.f32 %v1287, %v905
    %v1289 = vadd.f32 %v1288, %v906
    %v1290 = vadd.f32 %v1289, %v907
    %v1291 = vadd.f32 %v1290, %v908
    %v1292 = vadd.f32 %v1291, %v909
    %v1293 = vadd.f32 %v1292, %v910
    %v1294 = vadd.f32 %v1293, %v911
    %v1295 = vadd.f32 %v1294, %v912
    %v1296 = vadd.f32 %v1295, %v913
    %v1297 = vadd.f32 %v1296, %v914
    %v1298 = vadd.f32 %v1297, %v915
    %v1299 = vadd.f32 %v1298, %v916
    %v1300 = vadd.f32 %v1299, %v917
    %v1301 = vadd.f32 %v1300, %v918
    %v1302 = vadd.f32 %v1301, %v919
    %v1303 = vadd.f32 %v1302, %v920
    %v1304 = vadd.f32 %v1303, %v921
    %v1305 = vadd.f32 %v1304, %v922
    %v1306 = vadd.f32 %v1305, %v923
    %v1307 = vadd.f32 %v1306, %v924
    %v1308 = vadd.f32 %v1307, %v925
    %v1309 = vadd.f32 %v1308, %v926
    %v1310 = vadd.f32 %v1309, %v927
    %v1311 = vadd.f32 %v1310, %v928
    %v1312 = vadd.f32 %v1311, %v929
    %v1313 = vadd.f32 %v1312, %v930
    %v1314 = vadd.f32 %v1313, %v931
    %v1315 = vadd.f32 %v1314, %v932
    %v1316 = vadd.f32 %v1315, %v933
    %v1317 = vadd.f32 %v1316, %v934
    %v1318 = vadd.f32 %v1317, %v935
    %v1319 = vadd.f32 %v1318, %v936
    %v1320 = vadd.f32 %v1319, %v937
    %v1321 = vadd.f32 %v1320, %v938
    %v1322 = vadd.f32 %v1321, %v939
    %v1323 = vadd.f32 %v1322, %v940
    %v1324 = vadd.f32 %v1323, %v941
    %v1325 = vadd.f32 %v1324, %v942
    %v1326 = vadd.f32 %v1325, %v943
    %v1327 = vadd.f32 %v1326, %v944
    %v1328 = vadd.f32 %v1327, %v945
    %v1329 = vadd.f32 %v1328, %v946
    %v1330 = vadd.f32 %v1329, %v947
    %v1331 = vadd.f32 %v1330, %v948
    %v1332 = vadd.f32 %v1331, %v949
    %v1333 = vrot.slane %v1332, 4
    %v1334 = vadd.f32 %v1332, %v1333
    %v1335 = vrot.slane %v1334, 2
    %v1336 = vadd.f32 %v1334, %v1335
    %v1337 = vrot.slane %v1336, 1
    %v1338 = vadd.f32 %v1336, %v1337
    %v1339 = vmul.f32 %v886, %v886
    %v1340 = vmul.f32 %v887, %v887
    %v1341 = vmul.f32 %v888, %v888
    %v1342 = vmul.f32 %v889, %v889
    %v1343 = vmul.f32 %v890, %v890
    %v1344 = vmul.f32 %v891, %v891
    %v1345 = vmul.f32 %v892, %v892
    %v1346 = vmul.f32 %v893, %v893
    %v1347 = vmul.f32 %v894, %v894
    %v1348 = vmul.f32 %v895, %v895
    %v1349 = vmul.f32 %v896, %v896
    %v1350 = vmul.f32 %v897, %v897
    %v1351 = vmul.f32 %v898, %v898
    %v1352 = vmul.f32 %v899, %v899
    %v1353 = vmul.f32 %v900, %v900
    %v1354 = vmul.f32 %v901, %v901
    %v1355 = vmul.f32 %v902, %v902
    %v1356 = vmul.f32 %v903, %v903
    %v1357 = vmul.f32 %v904, %v904
    %v1358 = vmul.f32 %v905, %v905
    %v1359 = vmul.f32 %v906, %v906
    %v1360 = vmul.f32 %v907, %v907
    %v1361 = vmul.f32 %v908, %v908
    %v1362 = vmul.f32 %v909, %v909
    %v1363 = vmul.f32 %v910, %v910
    %v1364 = vmul.f32 %v911, %v911
    %v1365 = vmul.f32 %v912, %v912
    %v1366 = vmul.f32 %v913, %v913
    %v1367 = vmul.f32 %v914, %v914
    %v1368 = vmul.f32 %v915, %v915
    %v1369 = vmul.f32 %v916, %v916
    %v1370 = vmul.f32 %v917, %v917
    %v1371 = vmul.f32 %v918, %v918
    %v1372 = vmul.f32 %v919, %v919
    %v1373 = vmul.f32 %v920, %v920
    %v1374 = vmul.f32 %v921, %v921
    %v1375 = vmul.f32 %v922, %v922
    %v1376 = vmul.f32 %v923, %v923
    %v1377 = vmul.f32 %v924, %v924
    %v1378 = vmul.f32 %v925, %v925
    %v1379 = vmul.f32 %v926, %v926
    %v1380 = vmul.f32 %v927, %v927
    %v1381 = vmul.f32 %v928, %v928
    %v1382 = vmul.f32 %v929, %v929
    %v1383 = vmul.f32 %v930, %v930
    %v1384 = vmul.f32 %v931, %v931
    %v1385 = vmul.f32 %v932, %v932
    %v1386 = vmul.f32 %v933, %v933
    %v1387 = vmul.f32 %v934, %v934
    %v1388 = vmul.f32 %v935, %v935
    %v1389 = vmul.f32 %v936, %v936
    %v1390 = vmul.f32 %v937, %v937
    %v1391 = vmul.f32 %v938, %v938
    %v1392 = vmul.f32 %v939, %v939
    %v1393 = vmul.f32 %v940, %v940
    %v1394 = vmul.f32 %v941, %v941
    %v1395 = vmul.f32 %v942, %v942
    %v1396 = vmul.f32 %v943, %v943
    %v1397 = vmul.f32 %v944, %v944
    %v1398 = vmul.f32 %v945, %v945
    %v1399 = vmul.f32 %v946, %v946
    %v1400 = vmul.f32 %v947, %v947
    %v1401 = vmul.f32 %v948, %v948
    %v1402 = vmul.f32 %v949, %v949
    %v1403 = vadd.f32 %v1339, %v1340
    %v1404 = vadd.f32 %v1403, %v1341
    %v1405 = vadd.f32 %v1404, %v1342
    %v1406 = vadd.f32 %v1405, %v1343
    %v1407 = vadd.f32 %v1406, %v1344
    %v1408 = vadd.f32 %v1407, %v1345
    %v1409 = vadd.f32 %v1408, %v1346
    %v1410 = vadd.f32 %v1409, %v1347
    %v1411 = vadd.f32 %v1410, %v1348
    %v1412 = vadd.f32 %v1411, %v1349
    %v1413 = vadd.f32 %v1412, %v1350
    %v1414 = vadd.f32 %v1413, %v1351
    %v1415 = vadd.f32 %v1414, %v1352
    %v1416 = vadd.f32 %v1415, %v1353
    %v1417 = vadd.f32 %v1416, %v1354
    %v1418 = vadd.f32 %v1417, %v1355
    %v1419 = vadd.f32 %v1418, %v1356
    %v1420 = vadd.f32 %v1419, %v1357
    %v1421 = vadd.f32 %v1420, %v1358
    %v1422 = vadd.f32 %v1421, %v1359
    %v1423 = vadd.f32 %v1422, %v1360
    %v1424 = vadd.f32 %v1423, %v1361
    %v1425 = vadd.f32 %v1424, %v1362
    %v1426 = vadd.f32 %v1425, %v1363
    %v1427 = vadd.f32 %v1426, %v1364
    %v1428 = vadd.f32 %v1427, %v1365
    %v1429 = vadd.f32 %v1428, %v1366
    %v1430 = vadd.f32 %v1429, %v1367
    %v1431 = vadd.f32 %v1430, %v1368
    %v1432 = vadd.f32 %v1431, %v1369
    %v1433 = vadd.f32 %v1432, %v1370
    %v1434 = vadd.f32 %v1433, %v1371
    %v1435 = vadd.f32 %v1434, %v1372
    %v1436 = vadd.f32 %v1435, %v1373
    %v1437 = vadd.f32 %v1436, %v1374
    %v1438 = vadd.f32 %v1437, %v1375
    %v1439 = vadd.f32 %v1438, %v1376
    %v1440 = vadd.f32 %v1439, %v1377
    %v1441 = vadd.f32 %v1440, %v1378
    %v1442 = vadd.f32 %v1441, %v1379
    %v1443 = vadd.f32 %v1442, %v1380
    %v1444 = vadd.f32 %v1443, %v1381
    %v1445 = vadd.f32 %v1444, %v1382
    %v1446 = vadd.f32 %v1445, %v1383
    %v1447 = vadd.f32 %v1446, %v1384
    %v1448 = vadd.f32 %v1447, %v1385
    %v1449 = vadd.f32 %v1448, %v1386
    %v1450 = vadd.f32 %v1449, %v1387
    %v1451 = vadd.f32 %v1450, %v1388
    %v1452 = vadd.f32 %v1451, %v1389
    %v1453 = vadd.f32 %v1452, %v1390
    %v1454 = vadd.f32 %v1453, %v1391
    %v1455 = vadd.f32 %v1454, %v1392
    %v1456 = vadd.f32 %v1455, %v1393
    %v1457 = vadd.f32 %v1456, %v1394
    %v1458 = vadd.f32 %v1457, %v1395
    %v1459 = vadd.f32 %v1458, %v1396
    %v1460 = vadd.f32 %v1459, %v1397
    %v1461 = vadd.f32 %v1460, %v1398
    %v1462 = vadd.f32 %v1461, %v1399
    %v1463 = vadd.f32 %v1462, %v1400
    %v1464 = vadd.f32 %v1463, %v1401
    %v1465 = vadd.f32 %v1464, %v1402
    %v1466 = vrot.slane %v1465, 4
    %v1467 = vadd.f32 %v1465, %v1466
    %v1468 = vrot.slane %v1467, 2
    %v1469 = vadd.f32 %v1467, %v1468
    %v1470 = vrot.slane %v1469, 1
    %v1471 = vadd.f32 %v1469, %v1470
    %v1472 = vlaneseq
    %v1473 = vshrl.u32 %v1472, 7
    %vm1474 = vcmp.eq.s32.totalorder %v1473, 0
    %vm1475 = vcmp.eq.s32.totalorder %v1473, 1
    %v1476 = vsel %vm1475, %v1471, 0.0
    %v1477 = vsel %vm1474, %v1338, %v1476
    %1478 = vst [vmem:[%s3] sm:$0xff] %v1477
  $region17: #{basic_block_forward.4} parent=0 // pred_fallthru
    _
  // Predicated region
  $region18: #{basic_block_forward.4} parent=0 // pred_check
    _
  $region19: #{basic_block_forward.4} parent=0 // pred_check_branch
    %1480 = sbr.rel (0) target = $region21
  $region20: #{basic_block_forward.4} parent=0 // pred_region
    _
  $region21: #{basic_block_forward.4} parent=0 // pred_fallthru
    _
  // Predicated region
  $region22: #{basic_block_forward.4} parent=0 // pred_check
    _
  $region23: #{basic_block_forward.4} parent=0 // pred_check_branch
    %1482 = sbr.rel (0) target = $region25
  $region24: #{basic_block_forward.4} parent=0 // pred_region
    _
  $region25: #{basic_block_forward.4} parent=0 // pred_fallthru
    _
  // Predicated region
  $region26: #{basic_block_forward.4} parent=0 // pred_check
    _
  $region27: #{basic_block_forward.4} parent=0 // pred_check_branch
    %1484 = sbr.rel (0) target = $region29
  $region28: #{basic_block_forward.4} parent=0 // pred_region
    _
  $region29: #{basic_block_forward.4} parent=0 // pred_fallthru
    _
  // Predicated region
  $region30: #{basic_block_forward.4} parent=0 // pred_check
    _
  $region31: #{basic_block_forward.4} parent=0 // pred_check_branch
    %1486 = sbr.rel (0) target = $region33
  $region32: #{basic_block_forward.4} parent=0 // pred_region
    _
  $region33: #{basic_block_forward.4} parent=0 // pred_fallthru
    _

// kernel: basic_block_forward.7
$region0: #{basic_block_forward.7}
  #allocation0 [shape = 'u32[]', space=smem, size = 0x4, offset = 0x4, fixed_abs, tag = 'smem constant byte address 0x4 - core index']
  #allocation1 [shape = 'u32[144,128]{1,0:T(1,128)}', space=vmem, size = 0x12000, scoped, tag = 'internal scratch']
  %s0 = inlined_call_operand.vmem [shape: bf16[512,128], index: 0, kind: input, shape index: {}]
  %s1 = inlined_call_operand.vmem [shape: f32[1,128], index: 1, kind: input, shape index: {}]
  %s2 = inlined_call_operand.vmem [shape: f32[1,128], index: 2, kind: input, shape index: {}]
  %s3 = inlined_call_operand.vmem [shape: bf16[512,128], index: 3, kind: input, shape index: {}]
  %s4 = inlined_call_operand.vmem [shape: f32[512,128], index: 4, kind: output, shape index: {}]
  %s5 = sld [smem:[#allocation0]]
  $region26: #{basic_block_forward.7} parent=0
    _
  %s7 = ssub.s32 1, %s5
  %s8 = scalar_select 0, %s7, %s5
  // Predicated region
  $region2: #{basic_block_forward.7} parent=0 // pred_check
    _
  $region3: #{basic_block_forward.7} parent=0 // pred_check_branch
    %10 = sbr.rel (0) target = $region5
  $region4: #{basic_block_forward.7} parent=0 // pred_region
    _
  $region5: #{basic_block_forward.7} parent=0 // pred_fallthru
    _
  // Predicated region
  $region6: #{basic_block_forward.7} parent=0 // pred_check
    _
  $region7: #{basic_block_forward.7} parent=0 // pred_check_branch
    %12 = sbr.rel (0) target = $region9
  $region8: #{basic_block_forward.7} parent=0 // pred_region
    _
  $region9: #{basic_block_forward.7} parent=0 // pred_fallthru
    _
  // Predicated region
  $region10: #{basic_block_forward.7} parent=0 // pred_check
    _
  $region11: #{basic_block_forward.7} parent=0 // pred_check_branch
    %14 = sbr.rel (0) target = $region13
  $region12: #{basic_block_forward.7} parent=0 // pred_region
    _
  $region13: #{basic_block_forward.7} parent=0 // pred_fallthru
    _
  // Predicated region
  $region14: #{basic_block_forward.7} parent=0 // pred_check
    _
  $region15: #{basic_block_forward.7} parent=0 // pred_check_branch
    %16 = sbr.rel (0) target = $region17
  $region16: #{basic_block_forward.7} parent=0 // pred_region
    _
  $region17: #{basic_block_forward.7} parent=0 // pred_fallthru
    _
  %v17 = vld [vmem:[%s0] sm:$0xf]
  %v18 = vld [vmem:[%s0 + $0x4] sm:$0xf]
  %v19 = vld [vmem:[%s0 + $0x8] sm:$0xf]
  %v20 = vld [vmem:[%s0 + $0xc] sm:$0xf]
  %v21 = vld [vmem:[%s0 + $0x10] sm:$0xf]
  %v22 = vld [vmem:[%s0 + $0x14] sm:$0xf]
  %v23 = vld [vmem:[%s0 + $0x18] sm:$0xf]
  %v24 = vld [vmem:[%s0 + $0x1c] sm:$0xf]
  %v25 = vld [vmem:[%s0 + $0x20] sm:$0xf]
  %v26 = vld [vmem:[%s0 + $0x24] sm:$0xf]
  %v27 = vld [vmem:[%s0 + $0x28] sm:$0xf]
  %v28 = vld [vmem:[%s0 + $0x2c] sm:$0xf]
  %v29 = vld [vmem:[%s0 + $0x30] sm:$0xf]
  %v30 = vld [vmem:[%s0 + $0x34] sm:$0xf]
  %v31 = vld [vmem:[%s0 + $0x38] sm:$0xf]
  %v32 = vld [vmem:[%s0 + $0x3c] sm:$0xf]
  %v33 = vld [vmem:[%s0 + $0x40] sm:$0xf]
  %v34 = vld [vmem:[%s0 + $0x44] sm:$0xf]
  %v35 = vld [vmem:[%s0 + $0x48] sm:$0xf]
  %v36 = vld [vmem:[%s0 + $0x4c] sm:$0xf]
  %v37 = vld [vmem:[%s0 + $0x50] sm:$0xf]
  %v38 = vld [vmem:[%s0 + $0x54] sm:$0xf]
  %v39 = vld [vmem:[%s0 + $0x58] sm:$0xf]
  %v40 = vld [vmem:[%s0 + $0x5c] sm:$0xf]
  %v41 = vld [vmem:[%s0 + $0x60] sm:$0xf]
  %v42 = vld [vmem:[%s0 + $0x64] sm:$0xf]
  %v43 = vld [vmem:[%s0 + $0x68] sm:$0xf]
  %v44 = vld [vmem:[%s0 + $0x6c] sm:$0xf]
  %v45 = vld [vmem:[%s0 + $0x70] sm:$0xf]
  %v46 = vld [vmem:[%s0 + $0x74] sm:$0xf]
  %v47 = vld [vmem:[%s0 + $0x78] sm:$0xf]
  %v48 = vld [vmem:[%s0 + $0x7c] sm:$0xf]
  %v49 = vld [vmem:[%s0 + $0x80] sm:$0xf]
  %v50 = vld [vmem:[%s0 + $0x84] sm:$0xf]
  %v51 = vld [vmem:[%s0 + $0x88] sm:$0xf]
  %v52 = vld [vmem:[%s0 + $0x8c] sm:$0xf]
  %v53 = vld [vmem:[%s0 + $0x90] sm:$0xf]
  %v54 = vld [vmem:[%s0 + $0x94] sm:$0xf]
  %v55 = vld [vmem:[%s0 + $0x98] sm:$0xf]
  %v56 = vld [vmem:[%s0 + $0x9c] sm:$0xf]
  %v57 = vld [vmem:[%s0 + $0xa0] sm:$0xf]
  %v58 = vld [vmem:[%s0 + $0xa4] sm:$0xf]
  %v59 = vld [vmem:[%s0 + $0xa8] sm:$0xf]
  %v60 = vld [vmem:[%s0 + $0xac] sm:$0xf]
  %v61 = vld [vmem:[%s0 + $0xb0] sm:$0xf]
  %v62 = vld [vmem:[%s0 + $0xb4] sm:$0xf]
  %v63 = vld [vmem:[%s0 + $0xb8] sm:$0xf]
  %v64 = vld [vmem:[%s0 + $0xbc] sm:$0xf]
  %v65 = vld [vmem:[%s0 + $0xc0] sm:$0xf]
  %v66 = vld [vmem:[%s0 + $0xc4] sm:$0xf]
  %v67 = vld [vmem:[%s0 + $0xc8] sm:$0xf]
  %v68 = vld [vmem:[%s0 + $0xcc] sm:$0xf]
  %v69 = vld [vmem:[%s0 + $0xd0] sm:$0xf]
  %v70 = vld [vmem:[%s0 + $0xd4] sm:$0xf]
  %v71 = vld [vmem:[%s0 + $0xd8] sm:$0xf]
  %v72 = vld [vmem:[%s0 + $0xdc] sm:$0xf]
  %v73 = vld [vmem:[%s0 + $0xe0] sm:$0xf]
  %v74 = vld [vmem:[%s0 + $0xe4] sm:$0xf]
  %v75 = vld [vmem:[%s0 + $0xe8] sm:$0xf]
  %v76 = vld [vmem:[%s0 + $0xec] sm:$0xf]
  %v77 = vld [vmem:[%s0 + $0xf0] sm:$0xf]
  %v78 = vld [vmem:[%s0 + $0xf4] sm:$0xf]
  %v79 = vld [vmem:[%s0 + $0xf8] sm:$0xf]
  %v80 = vld [vmem:[%s0 + $0xfc] sm:$0xf]
  %v81 = vunpack.c.l.bf16 %v17
  %v82 = vunpack.c.l.bf16 %v18
  %v83 = vunpack.c.l.bf16 %v19
  %v84 = vunpack.c.l.bf16 %v20
  %v85 = vunpack.c.l.bf16 %v21
  %v86 = vunpack.c.l.bf16 %v22
  %v87 = vunpack.c.l.bf16 %v23
  %v88 = vunpack.c.l.bf16 %v24
  %v89 = vunpack.c.l.bf16 %v25
  %v90 = vunpack.c.l.bf16 %v26
  %v91 = vunpack.c.l.bf16 %v27
  %v92 = vunpack.c.l.bf16 %v28
  %v93 = vunpack.c.l.bf16 %v29
  %v94 = vunpack.c.l.bf16 %v30
  %v95 = vunpack.c.l.bf16 %v31
  %v96 = vunpack.c.l.bf16 %v32
  %v97 = vunpack.c.l.bf16 %v33
  %v98 = vunpack.c.l.bf16 %v34
  %v99 = vunpack.c.l.bf16 %v35
  %v100 = vunpack.c.l.bf16 %v36
  %v101 = vunpack.c.l.bf16 %v37
  %v102 = vunpack.c.l.bf16 %v38
  %v103 = vunpack.c.l.bf16 %v39
  %v104 = vunpack.c.l.bf16 %v40
  %v105 = vunpack.c.l.bf16 %v41
  %v106 = vunpack.c.l.bf16 %v42
  %v107 = vunpack.c.l.bf16 %v43
  %v108 = vunpack.c.l.bf16 %v44
  %v109 = vunpack.c.l.bf16 %v45
  %v110 = vunpack.c.l.bf16 %v46
  %v111 = vunpack.c.l.bf16 %v47
  %v112 = vunpack.c.l.bf16 %v48
  %v113 = vunpack.c.l.bf16 %v49
  %v114 = vunpack.c.l.bf16 %v50
  %v115 = vunpack.c.l.bf16 %v51
  %v116 = vunpack.c.l.bf16 %v52
  %v117 = vunpack.c.l.bf16 %v53
  %v118 = vunpack.c.l.bf16 %v54
  %v119 = vunpack.c.l.bf16 %v55
  %v120 = vunpack.c.l.bf16 %v56
  %v121 = vunpack.c.l.bf16 %v57
  %v122 = vunpack.c.l.bf16 %v58
  %v123 = vunpack.c.l.bf16 %v59
  %v124 = vunpack.c.l.bf16 %v60
  %v125 = vunpack.c.l.bf16 %v61
  %v126 = vunpack.c.l.bf16 %v62
  %v127 = vunpack.c.l.bf16 %v63
  %v128 = vunpack.c.l.bf16 %v64
  %v129 = vunpack.c.l.bf16 %v65
  %v130 = vunpack.c.l.bf16 %v66
  %v131 = vunpack.c.l.bf16 %v67
  %v132 = vunpack.c.l.bf16 %v68
  %v133 = vunpack.c.l.bf16 %v69
  %v134 = vunpack.c.l.bf16 %v70
  %v135 = vunpack.c.l.bf16 %v71
  %v136 = vunpack.c.l.bf16 %v72
  %v137 = vunpack.c.l.bf16 %v73
  %v138 = vunpack.c.l.bf16 %v74
  %v139 = vunpack.c.l.bf16 %v75
  %v140 = vunpack.c.l.bf16 %v76
  %v141 = vunpack.c.l.bf16 %v77
  %v142 = vunpack.c.l.bf16 %v78
  %v143 = vunpack.c.l.bf16 %v79
  %v144 = vunpack.c.l.bf16 %v80
  %v145 = vld [vmem:[%s1] sm:$0x1]
  %v147 = vlaneseq
  %v148 = vshrl.u32 %v147, 7
  %v149 = vsub.s32 0, %v148
  %v150 = vrot.slane %v145, %v149
  %v152 = vmul.f32 %v81, %v150
  %v153 = vmul.f32 %v82, %v150
  %v154 = vmul.f32 %v83, %v150
  %v155 = vmul.f32 %v84, %v150
  %v156 = vmul.f32 %v85, %v150
  %v157 = vmul.f32 %v86, %v150
  %v158 = vmul.f32 %v87, %v150
  %v159 = vmul.f32 %v88, %v150
  %v160 = vmul.f32 %v89, %v150
  %v161 = vmul.f32 %v90, %v150
  %v162 = vmul.f32 %v91, %v150
  %v163 = vmul.f32 %v92, %v150
  %v164 = vmul.f32 %v93, %v150
  %v165 = vmul.f32 %v94, %v150
  %v166 = vmul.f32 %v95, %v150
  %v167 = vmul.f32 %v96, %v150
  %v168 = vmul.f32 %v97, %v150
  %v169 = vmul.f32 %v98, %v150
  %v170 = vmul.f32 %v99, %v150
  %v171 = vmul.f32 %v100, %v150
  %v172 = vmul.f32 %v101, %v150
  %v173 = vmul.f32 %v102, %v150
  %v174 = vmul.f32 %v103, %v150
  %v175 = vmul.f32 %v104, %v150
  %v176 = vmul.f32 %v105, %v150
  %v177 = vmul.f32 %v106, %v150
  %v178 = vmul.f32 %v107, %v150
  %v179 = vmul.f32 %v108, %v150
  %v180 = vmul.f32 %v109, %v150
  %v181 = vmul.f32 %v110, %v150
  %v182 = vmul.f32 %v111, %v150
  %v183 = vmul.f32 %v112, %v150
  %v184 = vmul.f32 %v113, %v150
  %v185 = vmul.f32 %v114, %v150
  %v186 = vmul.f32 %v115, %v150
  %v187 = vmul.f32 %v116, %v150
  %v188 = vmul.f32 %v117, %v150
  %v189 = vmul.f32 %v118, %v150
  %v190 = vmul.f32 %v119, %v150
  %v191 = vmul.f32 %v120, %v150
  %v192 = vmul.f32 %v121, %v150
  %v193 = vmul.f32 %v122, %v150
  %v194 = vmul.f32 %v123, %v150
  %v195 = vmul.f32 %v124, %v150
  %v196 = vmul.f32 %v125, %v150
  %v197 = vmul.f32 %v126, %v150
  %v198 = vmul.f32 %v127, %v150
  %v199 = vmul.f32 %v128, %v150
  %v200 = vmul.f32 %v129, %v150
  %v201 = vmul.f32 %v130, %v150
  %v202 = vmul.f32 %v131, %v150
  %v203 = vmul.f32 %v132, %v150
  %v204 = vmul.f32 %v133, %v150
  %v205 = vmul.f32 %v134, %v150
  %v206 = vmul.f32 %v135, %v150
  %v207 = vmul.f32 %v136, %v150
  %v208 = vmul.f32 %v137, %v150
  %v209 = vmul.f32 %v138, %v150
  %v210 = vmul.f32 %v139, %v150
  %v211 = vmul.f32 %v140, %v150
  %v212 = vmul.f32 %v141, %v150
  %v213 = vmul.f32 %v142, %v150
  %v214 = vmul.f32 %v143, %v150
  %v215 = vmul.f32 %v144, %v150
  %v216 = vld [vmem:[%s2] sm:$0x1]
  %v218 = vlaneseq
  %v219 = vshrl.u32 %v218, 7
  %v220 = vsub.s32 0, %v219
  %v221 = vrot.slane %v216, %v220
  %v223 = vadd.f32 %v152, %v221
  %v224 = vadd.f32 %v153, %v221
  %v225 = vadd.f32 %v154, %v221
  %v226 = vadd.f32 %v155, %v221
  %v227 = vadd.f32 %v156, %v221
  %v228 = vadd.f32 %v157, %v221
  %v229 = vadd.f32 %v158, %v221
  %v230 = vadd.f32 %v159, %v221
  %v231 = vadd.f32 %v160, %v221
  %v232 = vadd.f32 %v161, %v221
  %v233 = vadd.f32 %v162, %v221
  %v234 = vadd.f32 %v163, %v221
  %v235 = vadd.f32 %v164, %v221
  %v236 = vadd.f32 %v165, %v221
  %v237 = vadd.f32 %v166, %v221
  %v238 = vadd.f32 %v167, %v221
  %v239 = vadd.f32 %v168, %v221
  %v240 = vadd.f32 %v169, %v221
  %v241 = vadd.f32 %v170, %v221
  %v242 = vadd.f32 %v171, %v221
  %v243 = vadd.f32 %v172, %v221
  %v244 = vadd.f32 %v173, %v221
  %v245 = vadd.f32 %v174, %v221
  %v246 = vadd.f32 %v175, %v221
  %v247 = vadd.f32 %v176, %v221
  %v248 = vadd.f32 %v177, %v221
  %v249 = vadd.f32 %v178, %v221
  %v250 = vadd.f32 %v179, %v221
  %v251 = vadd.f32 %v180, %v221
  %v252 = vadd.f32 %v181, %v221
  %v253 = vadd.f32 %v182, %v221
  %v254 = vadd.f32 %v183, %v221
  %v255 = vadd.f32 %v184, %v221
  %v256 = vadd.f32 %v185, %v221
  %v257 = vadd.f32 %v186, %v221
  %v258 = vadd.f32 %v187, %v221
  %v259 = vadd.f32 %v188, %v221
  %v260 = vadd.f32 %v189, %v221
  %v261 = vadd.f32 %v190, %v221
  %v262 = vadd.f32 %v191, %v221
  %v263 = vadd.f32 %v192, %v221
  %v264 = vadd.f32 %v193, %v221
  %v265 = vadd.f32 %v194, %v221
  %v266 = vadd.f32 %v195, %v221
  %v267 = vadd.f32 %v196, %v221
  %v268 = vadd.f32 %v197, %v221
  %v269 = vadd.f32 %v198, %v221
  %v270 = vadd.f32 %v199, %v221
  %v271 = vadd.f32 %v200, %v221
  %v272 = vadd.f32 %v201, %v221
  %v273 = vadd.f32 %v202, %v221
  %v274 = vadd.f32 %v203, %v221
  %v275 = vadd.f32 %v204, %v221
  %v276 = vadd.f32 %v205, %v221
  %v277 = vadd.f32 %v206, %v221
  %v278 = vadd.f32 %v207, %v221
  %v279 = vadd.f32 %v208, %v221
  %v280 = vadd.f32 %v209, %v221
  %v281 = vadd.f32 %v210, %v221
  %v282 = vadd.f32 %v211, %v221
  %v283 = vadd.f32 %v212, %v221
  %v284 = vadd.f32 %v213, %v221
  %v285 = vadd.f32 %v214, %v221
  %v286 = vadd.f32 %v215, %v221
  %v287 = vld [vmem:[%s3] sm:$0xf]
  %v288 = vld [vmem:[%s3 + $0x4] sm:$0xf]
  %v289 = vld [vmem:[%s3 + $0x8] sm:$0xf]
  %v290 = vld [vmem:[%s3 + $0xc] sm:$0xf]
  %v291 = vld [vmem:[%s3 + $0x10] sm:$0xf]
  %v292 = vld [vmem:[%s3 + $0x14] sm:$0xf]
  %v293 = vld [vmem:[%s3 + $0x18] sm:$0xf]
  %v294 = vld [vmem:[%s3 + $0x1c] sm:$0xf]
  %v295 = vld [vmem:[%s3 + $0x20] sm:$0xf]
  %v296 = vld [vmem:[%s3 + $0x24] sm:$0xf]
  %v297 = vld [vmem:[%s3 + $0x28] sm:$0xf]
  %v298 = vld [vmem:[%s3 + $0x2c] sm:$0xf]
  %v299 = vld [vmem:[%s3 + $0x30] sm:$0xf]
  %v300 = vld [vmem:[%s3 + $0x34] sm:$0xf]
  %v301 = vld [vmem:[%s3 + $0x38] sm:$0xf]
  %v302 = vld [vmem:[%s3 + $0x3c] sm:$0xf]
  %v303 = vld [vmem:[%s3 + $0x40] sm:$0xf]
  %v304 = vld [vmem:[%s3 + $0x44] sm:$0xf]
  %v305 = vld [vmem:[%s3 + $0x48] sm:$0xf]
  %v306 = vld [vmem:[%s3 + $0x4c] sm:$0xf]
  %v307 = vld [vmem:[%s3 + $0x50] sm:$0xf]
  %v308 = vld [vmem:[%s3 + $0x54] sm:$0xf]
  %v309 = vld [vmem:[%s3 + $0x58] sm:$0xf]
  %v310 = vld [vmem:[%s3 + $0x5c] sm:$0xf]
  %v311 = vld [vmem:[%s3 + $0x60] sm:$0xf]
  %v312 = vld [vmem:[%s3 + $0x64] sm:$0xf]
  %v313 = vld [vmem:[%s3 + $0x68] sm:$0xf]
  %v314 = vld [vmem:[%s3 + $0x6c] sm:$0xf]
  %v315 = vld [vmem:[%s3 + $0x70] sm:$0xf]
  %v316 = vld [vmem:[%s3 + $0x74] sm:$0xf]
  %v317 = vld [vmem:[%s3 + $0x78] sm:$0xf]
  %v318 = vld [vmem:[%s3 + $0x7c] sm:$0xf]
  %v319 = vld [vmem:[%s3 + $0x80] sm:$0xf]
  %v320 = vld [vmem:[%s3 + $0x84] sm:$0xf]
  %v321 = vld [vmem:[%s3 + $0x88] sm:$0xf]
  %v322 = vld [vmem:[%s3 + $0x8c] sm:$0xf]
  %v323 = vld [vmem:[%s3 + $0x90] sm:$0xf]
  %v324 = vld [vmem:[%s3 + $0x94] sm:$0xf]
  %v325 = vld [vmem:[%s3 + $0x98] sm:$0xf]
  %v326 = vld [vmem:[%s3 + $0x9c] sm:$0xf]
  %v327 = vld [vmem:[%s3 + $0xa0] sm:$0xf]
  %v328 = vld [vmem:[%s3 + $0xa4] sm:$0xf]
  %v329 = vld [vmem:[%s3 + $0xa8] sm:$0xf]
  %v330 = vld [vmem:[%s3 + $0xac] sm:$0xf]
  %v331 = vld [vmem:[%s3 + $0xb0] sm:$0xf]
  %v332 = vld [vmem:[%s3 + $0xb4] sm:$0xf]
  %v333 = vld [vmem:[%s3 + $0xb8] sm:$0xf]
  %v334 = vld [vmem:[%s3 + $0xbc] sm:$0xf]
  %v335 = vld [vmem:[%s3 + $0xc0] sm:$0xf]
  %v336 = vld [vmem:[%s3 + $0xc4] sm:$0xf]
  %v337 = vld [vmem:[%s3 + $0xc8] sm:$0xf]
  %v338 = vld [vmem:[%s3 + $0xcc] sm:$0xf]
  %v339 = vld [vmem:[%s3 + $0xd0] sm:$0xf]
  %v340 = vld [vmem:[%s3 + $0xd4] sm:$0xf]
  %v341 = vld [vmem:[%s3 + $0xd8] sm:$0xf]
  %v342 = vld [vmem:[%s3 + $0xdc] sm:$0xf]
  %v343 = vld [vmem:[%s3 + $0xe0] sm:$0xf]
  %v344 = vld [vmem:[%s3 + $0xe4] sm:$0xf]
  %v345 = vld [vmem:[%s3 + $0xe8] sm:$0xf]
  %v346 = vld [vmem:[%s3 + $0xec] sm:$0xf]
  %v347 = vld [vmem:[%s3 + $0xf0] sm:$0xf]
  %v348 = vld [vmem:[%s3 + $0xf4] sm:$0xf]
  %v349 = vld [vmem:[%s3 + $0xf8] sm:$0xf]
  %v350 = vld [vmem:[%s3 + $0xfc] sm:$0xf]
  %v351 = vunpack.c.l.bf16 %v287
  %v352 = vunpack.c.l.bf16 %v288
  %v353 = vunpack.c.l.bf16 %v289
  %v354 = vunpack.c.l.bf16 %v290
  %v355 = vunpack.c.l.bf16 %v291
  %v356 = vunpack.c.l.bf16 %v292
  %v357 = vunpack.c.l.bf16 %v293
  %v358 = vunpack.c.l.bf16 %v294
  %v359 = vunpack.c.l.bf16 %v295
  %v360 = vunpack.c.l.bf16 %v296
  %v361 = vunpack.c.l.bf16 %v297
  %v362 = vunpack.c.l.bf16 %v298
  %v363 = vunpack.c.l.bf16 %v299
  %v364 = vunpack.c.l.bf16 %v300
  %v365 = vunpack.c.l.bf16 %v301
  %v366 = vunpack.c.l.bf16 %v302
  %v367 = vunpack.c.l.bf16 %v303
  %v368 = vunpack.c.l.bf16 %v304
  %v369 = vunpack.c.l.bf16 %v305
  %v370 = vunpack.c.l.bf16 %v306
  %v371 = vunpack.c.l.bf16 %v307
  %v372 = vunpack.c.l.bf16 %v308
  %v373 = vunpack.c.l.bf16 %v309
  %v374 = vunpack.c.l.bf16 %v310
  %v375 = vunpack.c.l.bf16 %v311
  %v376 = vunpack.c.l.bf16 %v312
  %v377 = vunpack.c.l.bf16 %v313
  %v378 = vunpack.c.l.bf16 %v314
  %v379 = vunpack.c.l.bf16 %v315
  %v380 = vunpack.c.l.bf16 %v316
  %v381 = vunpack.c.l.bf16 %v317
  %v382 = vunpack.c.l.bf16 %v318
  %v383 = vunpack.c.l.bf16 %v319
  %v384 = vunpack.c.l.bf16 %v320
  %v385 = vunpack.c.l.bf16 %v321
  %v386 = vunpack.c.l.bf16 %v322
  %v387 = vunpack.c.l.bf16 %v323
  %v388 = vunpack.c.l.bf16 %v324
  %v389 = vunpack.c.l.bf16 %v325
  %v390 = vunpack.c.l.bf16 %v326
  %v391 = vunpack.c.l.bf16 %v327
  %v392 = vunpack.c.l.bf16 %v328
  %v393 = vunpack.c.l.bf16 %v329
  %v394 = vunpack.c.l.bf16 %v330
  %v395 = vunpack.c.l.bf16 %v331
  %v396 = vunpack.c.l.bf16 %v332
  %v397 = vunpack.c.l.bf16 %v333
  %v398 = vunpack.c.l.bf16 %v334
  %v399 = vunpack.c.l.bf16 %v335
  %v400 = vunpack.c.l.bf16 %v336
  %v401 = vunpack.c.l.bf16 %v337
  %v402 = vunpack.c.l.bf16 %v338
  %v403 = vunpack.c.l.bf16 %v339
  %v404 = vunpack.c.l.bf16 %v340
  %v405 = vunpack.c.l.bf16 %v341
  %v406 = vunpack.c.l.bf16 %v342
  %v407 = vunpack.c.l.bf16 %v343
  %v408 = vunpack.c.l.bf16 %v344
  %v409 = vunpack.c.l.bf16 %v345
  %v410 = vunpack.c.l.bf16 %v346
  %v411 = vunpack.c.l.bf16 %v347
  %v412 = vunpack.c.l.bf16 %v348
  %v413 = vunpack.c.l.bf16 %v349
  %v414 = vunpack.c.l.bf16 %v350
  %v415 = vadd.f32 %v223, %v351
  %v416 = vadd.f32 %v224, %v352
  %v417 = vadd.f32 %v225, %v353
  %v418 = vadd.f32 %v226, %v354
  %v419 = vadd.f32 %v227, %v355
  %v420 = vadd.f32 %v228, %v356
  %v421 = vadd.f32 %v229, %v357
  %v422 = vadd.f32 %v230, %v358
  %v423 = vadd.f32 %v231, %v359
  %v424 = vadd.f32 %v232, %v360
  %v425 = vadd.f32 %v233, %v361
  %v426 = vadd.f32 %v234, %v362
  %v427 = vadd.f32 %v235, %v363
  %v428 = vadd.f32 %v236, %v364
  %v429 = vadd.f32 %v237, %v365
  %v430 = vadd.f32 %v238, %v366
  %v431 = vadd.f32 %v239, %v367
  %v432 = vadd.f32 %v240, %v368
  %v433 = vadd.f32 %v241, %v369
  %v434 = vadd.f32 %v242, %v370
  %v435 = vadd.f32 %v243, %v371
  %v436 = vadd.f32 %v244, %v372
  %v437 = vadd.f32 %v245, %v373
  %v438 = vadd.f32 %v246, %v374
  %v439 = vadd.f32 %v247, %v375
  %v440 = vadd.f32 %v248, %v376
  %v441 = vadd.f32 %v249, %v377
  %v442 = vadd.f32 %v250, %v378
  %v443 = vadd.f32 %v251, %v379
  %v444 = vadd.f32 %v252, %v380
  %v445 = vadd.f32 %v253, %v381
  %v446 = vadd.f32 %v254, %v382
  %v447 = vadd.f32 %v255, %v383
  %v448 = vadd.f32 %v256, %v384
  %v449 = vadd.f32 %v257, %v385
  %v450 = vadd.f32 %v258, %v386
  %v451 = vadd.f32 %v259, %v387
  %v452 = vadd.f32 %v260, %v388
  %v453 = vadd.f32 %v261, %v389
  %v454 = vadd.f32 %v262, %v390
  %v455 = vadd.f32 %v263, %v391
  %v456 = vadd.f32 %v264, %v392
  %v457 = vadd.f32 %v265, %v393
  %v458 = vadd.f32 %v266, %v394
  %v459 = vadd.f32 %v267, %v395
  %v460 = vadd.f32 %v268, %v396
  %v461 = vadd.f32 %v269, %v397
  %v462 = vadd.f32 %v270, %v398
  %v463 = vadd.f32 %v271, %v399
  %v464 = vadd.f32 %v272, %v400
  %v465 = vadd.f32 %v273, %v401
  %v466 = vadd.f32 %v274, %v402
  %v467 = vadd.f32 %v275, %v403
  %v468 = vadd.f32 %v276, %v404
  %v469 = vadd.f32 %v277, %v405
  %v470 = vadd.f32 %v278, %v406
  %v471 = vadd.f32 %v279, %v407
  %v472 = vadd.f32 %v280, %v408
  %v473 = vadd.f32 %v281, %v409
  %v474 = vadd.f32 %v282, %v410
  %v475 = vadd.f32 %v283, %v411
  %v476 = vadd.f32 %v284, %v412
  %v477 = vadd.f32 %v285, %v413
  %v478 = vadd.f32 %v286, %v414
  %v479 = vmax.f32 %v415, 0.0
  %v480 = vmax.f32 %v416, 0.0
  %v481 = vmax.f32 %v417, 0.0
  %v482 = vmax.f32 %v418, 0.0
  %v483 = vmax.f32 %v419, 0.0
  %v484 = vmax.f32 %v420, 0.0
  %v485 = vmax.f32 %v421, 0.0
  %v486 = vmax.f32 %v422, 0.0
  %v487 = vmax.f32 %v423, 0.0
  %v488 = vmax.f32 %v424, 0.0
  %v489 = vmax.f32 %v425, 0.0
  %v490 = vmax.f32 %v426, 0.0
  %v491 = vmax.f32 %v427, 0.0
  %v492 = vmax.f32 %v428, 0.0
  %v493 = vmax.f32 %v429, 0.0
  %v494 = vmax.f32 %v430, 0.0
  %v495 = vmax.f32 %v431, 0.0
  %v496 = vmax.f32 %v432, 0.0
  %v497 = vmax.f32 %v433, 0.0
  %v498 = vmax.f32 %v434, 0.0
  %v499 = vmax.f32 %v435, 0.0
  %v500 = vmax.f32 %v436, 0.0
  %v501 = vmax.f32 %v437, 0.0
  %v502 = vmax.f32 %v438, 0.0
  %v503 = vmax.f32 %v439, 0.0
  %v504 = vmax.f32 %v440, 0.0
  %v505 = vmax.f32 %v441, 0.0
  %v506 = vmax.f32 %v442, 0.0
  %v507 = vmax.f32 %v443, 0.0
  %v508 = vmax.f32 %v444, 0.0
  %v509 = vmax.f32 %v445, 0.0
  %v510 = vmax.f32 %v446, 0.0
  %v511 = vmax.f32 %v447, 0.0
  %v512 = vmax.f32 %v448, 0.0
  %v513 = vmax.f32 %v449, 0.0
  %v514 = vmax.f32 %v450, 0.0
  %v515 = vmax.f32 %v451, 0.0
  %v516 = vmax.f32 %v452, 0.0
  %v517 = vmax.f32 %v453, 0.0
  %v518 = vmax.f32 %v454, 0.0
  %v519 = vmax.f32 %v455, 0.0
  %v520 = vmax.f32 %v456, 0.0
  %v521 = vmax.f32 %v457, 0.0
  %v522 = vmax.f32 %v458, 0.0
  %v523 = vmax.f32 %v459, 0.0
  %v524 = vmax.f32 %v460, 0.0
  %v525 = vmax.f32 %v461, 0.0
  %v526 = vmax.f32 %v462, 0.0
  %v527 = vmax.f32 %v463, 0.0
  %v528 = vmax.f32 %v464, 0.0
  %v529 = vmax.f32 %v465, 0.0
  %v530 = vmax.f32 %v466, 0.0
  %v531 = vmax.f32 %v467, 0.0
  %v532 = vmax.f32 %v468, 0.0
  %v533 = vmax.f32 %v469, 0.0
  %v534 = vmax.f32 %v470, 0.0
  %v535 = vmax.f32 %v471, 0.0
  %v536 = vmax.f32 %v472, 0.0
  %v537 = vmax.f32 %v473, 0.0
  %v538 = vmax.f32 %v474, 0.0
  %v539 = vmax.f32 %v475, 0.0
  %v540 = vmax.f32 %v476, 0.0
  %v541 = vmax.f32 %v477, 0.0
  %v542 = vmax.f32 %v478, 0.0
  %543 = vst [vmem:[%s4] sm:$0xff] %v479
  %544 = vst [vmem:[%s4 + $0x8] sm:$0xff] %v480
  %545 = vst [vmem:[%s4 + $0x10] sm:$0xff] %v481
  %546 = vst [vmem:[%s4 + $0x18] sm:$0xff] %v482
  %547 = vst [vmem:[%s4 + $0x20] sm:$0xff] %v483
  %548 = vst [vmem:[%s4 + $0x28] sm:$0xff] %v484
  %549 = vst [vmem:[%s4 + $0x30] sm:$0xff] %v485
  %550 = vst [vmem:[%s4 + $0x38] sm:$0xff] %v486
  %551 = vst [vmem:[%s4 + $0x40] sm:$0xff] %v487
  %552 = vst [vmem:[%s4 + $0x48] sm:$0xff] %v488
  %553 = vst [vmem:[%s4 + $0x50] sm:$0xff] %v489
  %554 = vst [vmem:[%s4 + $0x58] sm:$0xff] %v490
  %555 = vst [vmem:[%s4 + $0x60] sm:$0xff] %v491
  %556 = vst [vmem:[%s4 + $0x68] sm:$0xff] %v492
  %557 = vst [vmem:[%s4 + $0x70] sm:$0xff] %v493
  %558 = vst [vmem:[%s4 + $0x78] sm:$0xff] %v494
  %559 = vst [vmem:[%s4 + $0x80] sm:$0xff] %v495
  %560 = vst [vmem:[%s4 + $0x88] sm:$0xff] %v496
  %561 = vst [vmem:[%s4 + $0x90] sm:$0xff] %v497
  %562 = vst [vmem:[%s4 + $0x98] sm:$0xff] %v498
  %563 = vst [vmem:[%s4 + $0xa0] sm:$0xff] %v499
  %564 = vst [vmem:[%s4 + $0xa8] sm:$0xff] %v500
  %565 = vst [vmem:[%s4 + $0xb0] sm:$0xff] %v501
  %566 = vst [vmem:[%s4 + $0xb8] sm:$0xff] %v502
  %567 = vst [vmem:[%s4 + $0xc0] sm:$0xff] %v503
  %568 = vst [vmem:[%s4 + $0xc8] sm:$0xff] %v504
  %569 = vst [vmem:[%s4 + $0xd0] sm:$0xff] %v505
  %570 = vst [vmem:[%s4 + $0xd8] sm:$0xff] %v506
  %571 = vst [vmem:[%s4 + $0xe0] sm:$0xff] %v507
  %572 = vst [vmem:[%s4 + $0xe8] sm:$0xff] %v508
  %573 = vst [vmem:[%s4 + $0xf0] sm:$0xff] %v509
  %574 = vst [vmem:[%s4 + $0xf8] sm:$0xff] %v510
  %575 = vst [vmem:[%s4 + $0x100] sm:$0xff] %v511
  %576 = vst [vmem:[%s4 + $0x108] sm:$0xff] %v512
  %577 = vst [vmem:[%s4 + $0x110] sm:$0xff] %v513
  %578 = vst [vmem:[%s4 + $0x118] sm:$0xff] %v514
  %579 = vst [vmem:[%s4 + $0x120] sm:$0xff] %v515
  %580 = vst [vmem:[%s4 + $0x128] sm:$0xff] %v516
  %581 = vst [vmem:[%s4 + $0x130] sm:$0xff] %v517
  %582 = vst [vmem:[%s4 + $0x138] sm:$0xff] %v518
  %583 = vst [vmem:[%s4 + $0x140] sm:$0xff] %v519
  %584 = vst [vmem:[%s4 + $0x148] sm:$0xff] %v520
  %585 = vst [vmem:[%s4 + $0x150] sm:$0xff] %v521
  %586 = vst [vmem:[%s4 + $0x158] sm:$0xff] %v522
  %587 = vst [vmem:[%s4 + $0x160] sm:$0xff] %v523
  %588 = vst [vmem:[%s4 + $0x168] sm:$0xff] %v524
  %589 = vst [vmem:[%s4 + $0x170] sm:$0xff] %v525
  %590 = vst [vmem:[%s4 + $0x178] sm:$0xff] %v526
  %591 = vst [vmem:[%s4 + $0x180] sm:$0xff] %v527
  %592 = vst [vmem:[%s4 + $0x188] sm:$0xff] %v528
  %593 = vst [vmem:[%s4 + $0x190] sm:$0xff] %v529
  %594 = vst [vmem:[%s4 + $0x198] sm:$0xff] %v530
  %595 = vst [vmem:[%s4 + $0x1a0] sm:$0xff] %v531
  %596 = vst [vmem:[%s4 + $0x1a8] sm:$0xff] %v532
  %597 = vst [vmem:[%s4 + $0x1b0] sm:$0xff] %v533
  %598 = vst [vmem:[%s4 + $0x1b8] sm:$0xff] %v534
  %599 = vst [vmem:[%s4 + $0x1c0] sm:$0xff] %v535
  %600 = vst [vmem:[%s4 + $0x1c8] sm:$0xff] %v536
  %601 = vst [vmem:[%s4 + $0x1d0] sm:$0xff] %v537
  %602 = vst [vmem:[%s4 + $0x1d8] sm:$0xff] %v538
  %603 = vst [vmem:[%s4 + $0x1e0] sm:$0xff] %v539
  %604 = vst [vmem:[%s4 + $0x1e8] sm:$0xff] %v540
  %605 = vst [vmem:[%s4 + $0x1f0] sm:$0xff] %v541
  %606 = vst [vmem:[%s4 + $0x1f8] sm:$0xff] %v542
  // Predicated region
  $region18: #{basic_block_forward.7} parent=0 // pred_check
    _
  $region19: #{basic_block_forward.7} parent=0 // pred_check_branch
    %608 = sbr.rel (0) target = $region21
  $region20: #{basic_block_forward.7} parent=0 // pred_region
    _
  $region21: #{basic_block_forward.7} parent=0 // pred_fallthru
    _
  // Predicated region
  $region22: #{basic_block_forward.7} parent=0 // pred_check
    _
  $region23: #{basic_block_forward.7} parent=0 // pred_check_branch
    %610 = sbr.rel (0) target = $region25
  $region24: #{basic_block_forward.7} parent=0 // pred_region
    _
  $region25: #{basic_block_forward.7} parent=0 // pred_fallthru
    _

</llo_original>
